<compile_context>
chip_gen: v5e
topology: v5e:2x2
jax: 0.10.0
libtpu: 0.0.40
codegen_flags: <defaults>
</compile_context>

<pallas_src>
import math
from functools import partial

import jax
import jax.numpy as jnp
from jax import lax
from jax.experimental import pallas as pl
from jax.experimental.pallas import tpu as pltpu


# ---------------------------------------------------------------------------
# Helpers
# ---------------------------------------------------------------------------
def _const_spec(shape):
    """Weight/bias block: constant index map across the whole grid.

    Single-buffered: the same block is reused every grid step, so a second
    pipeline buffer would only waste VMEM.
    """
    idx = lambda *_: (0,) * len(shape)
    try:
        return pl.BlockSpec(shape, idx, pipeline_mode=pl.Buffered(1))
    except TypeError:  # older jax without pipeline_mode on BlockSpec
        return pl.BlockSpec(shape, idx)


def _pick_tile(S, prefer):
    """Largest convenient tile that divides S and respects (8,128) tiling."""
    for t in prefer:
        if t <= S and S % t == 0:
            return t
    return S  # tiny / odd S: a single full-extent block


# ---------------------------------------------------------------------------
# Kernel 1: fused K|V projection   kv = x @ [wk|wv] + [bk|bv]
#   Runs once per (batch, seq-tile); output already in the compute dtype so
#   the attention kernel streams bf16 K/V (half the DMA bytes / VMEM).
# ---------------------------------------------------------------------------
def kv_proj_kernel(x_ref, wkv_ref, bkv_ref, kv_ref):
    x = x_ref[0].astype(wkv_ref.dtype)                                # (TS, D)
    kv = jnp.dot(x, wkv_ref[...], preferred_element_type=jnp.float32)
    kv_ref[0] = (kv + bkv_ref[...]).astype(kv_ref.dtype)              # (TS, 2H)


# ---------------------------------------------------------------------------
# Kernel 2: flash-style attention + output dense + residual + TF LayerNorm
#   grid = (B, n_q, n_k); the key axis is an online-softmax reduction.
# ---------------------------------------------------------------------------
def attention_kernel(
    xq_ref,            # (1, TQ, D) f32   query rows of this tile (also residual)
    k_ref,             # (1, n_heads, TK, dh)  compute dtype
    v_ref,             # (1, n_heads, TK, dh)  compute dtype
    wq_ref, bq_ref,    # (D, H) [1/sqrt(dh) folded in], (1, H) f32
    wd_ref, bd_ref,    # (H, H), (1, H) f32
    g_ref, beta_ref,   # LayerNorm weight / bias: (1, H) f32
    o_ref,             # (1, TQ, H)
    q_sc,              # VMEM (n_heads, TQ, dh)  compute dtype
    m_sc, l_sc,        # VMEM (n_heads, TQ, 1)   f32
    acc_sc,            # VMEM (n_heads, TQ, dh)  f32
    *,
    num_heads: int,
    head_dim: int,
    eps: float,
):
    H = num_heads * head_dim
    mm = wq_ref.dtype                 # matmul operand dtype (f32 or bf16)
    TQ = xq_ref.shape[1]
    kv_i = pl.program_id(2)

    # ---- once per (batch, query-tile): project Q, init online-softmax state
    @pl.when(kv_i == 0)
    def _init():
        xq = xq_ref[0].astype(mm)                                      # (TQ, D)
        q = jnp.dot(xq, wq_ref[...],
                    preferred_element_type=jnp.float32) + bq_ref[...]  # (TQ, H)
        q_sc[...] = jnp.transpose(
            q.reshape(TQ, num_heads, head_dim), (1, 0, 2)).astype(q_sc.dtype)
        m_sc[...] = jnp.full(m_sc.shape, -jnp.inf, dtype=m_sc.dtype)
        l_sc[...] = jnp.zeros(l_sc.shape, dtype=l_sc.dtype)
        acc_sc[...] = jnp.zeros(acc_sc.shape, dtype=acc_sc.dtype)

    # ---- per key tile: batched-head scores + online softmax update ----
    k3 = k_ref[0]                                                      # (n, TK, dh)
    v3 = v_ref[0]
    s = jnp.einsum("nqd,nkd->nqk", q_sc[...], k3,
                   preferred_element_type=jnp.float32)                 # (n, TQ, TK)

    m_new = jnp.maximum(m_sc[...], s.max(-1, keepdims=True))
    alpha = jnp.exp(m_sc[...] - m_new)
    p = jnp.exp(s - m_new)
    l_sc[...] = alpha * l_sc[...] + p.sum(-1, keepdims=True)
    acc_sc[...] = alpha * acc_sc[...] + jnp.einsum(
        "nqk,nkd->nqd", p.astype(mm), v3,
        preferred_element_type=jnp.float32)                            # (n, TQ, dh)
    m_sc[...] = m_new
    # attn_dropout: identity (eval mode).

    # ---- once per (batch, query-tile): dense + residual + LayerNorm ----
    @pl.when(kv_i == pl.num_programs(2) - 1)
    def _finalize():
        ctx = acc_sc[...] * pl.reciprocal(l_sc[...], approx=True)      # (n, TQ, dh)
        context = jnp.transpose(ctx, (1, 0, 2)).reshape(TQ, H)         # (TQ, H)
        hidden = jnp.dot(context.astype(mm), wd_ref[...],
                         preferred_element_type=jnp.float32) + bd_ref[...]
        # out_dropout: identity (eval mode).
        hidden = hidden + xq_ref[0]                                    # needs D == H
        u = jnp.mean(hidden, axis=-1, keepdims=True)
        d = hidden - u
        var = jnp.mean(d * d, axis=-1, keepdims=True)
        o_ref[0] = (g_ref[...] * (d * lax.rsqrt(var + eps))
                    + beta_ref[...]).astype(o_ref.dtype)


# ---------------------------------------------------------------------------
# Wrapper
# ---------------------------------------------------------------------------
@partial(jax.jit, static_argnames=("num_heads", "eps", "compute_dtype",
                                   "q_tile", "k_tile", "vmem_limit_mb"))
def self_attention(x, params, *, num_heads, eps=1e-12,
                   compute_dtype=jnp.float32, q_tile=None, k_tile=None,
                   vmem_limit_mb=48):
    """x: (B, S, D) float32.  params: dict of weights (see init_params)."""
    B, S, D = x.shape
    H = params["wq"].shape[1]
    assert H % num_heads == 0
    head_dim = H // num_heads
    assert D == H, "residual add requires in_dim == hid_dim"

    # Tile sizes. TQ >= 256 keeps the MXU M-dim full on v6e/v7x (128 is enough
    # on v5e); raise vmem_limit_mb to ~96 on v5e/v6e if you want TQ=512.
    if q_tile is None:
        q_tile = _pick_tile(S, (256, 128, 64, 32, 16, 8))
    if k_tile is None:
        k_tile = _pick_tile(S, (512, 256, 128, 64, 32, 16, 8))
    assert S % q_tile == 0 and S % k_tile == 0
    n_q, n_k = S // q_tile, S // k_tile
    s_tile = _pick_tile(S, (512, 256, 128, 64, 32, 16, 8))
    n_s = S // s_tile

    itemsize = jnp.dtype(compute_dtype).itemsize
    vmem_bytes = int(vmem_limit_mb) * 1024 * 1024

    # Fold 1/sqrt(head_dim) into the query projection; fuse K|V weights; cast
    # matmul operands to the compute dtype (bf16 doubles MXU throughput on all
    # generations). Biases / LayerNorm params stay f32.
    scale = 1.0 / math.sqrt(head_dim)
    wq = (params["wq"] * scale).astype(compute_dtype)
    bq = params["bq"] * scale
    wkv = jnp.concatenate([params["wk"], params["wv"]], axis=1).astype(compute_dtype)
    bkv = jnp.concatenate([params["bk"], params["bv"]], axis=1)
    wd = params["wd"].astype(compute_dtype)
    bd = params["bd"]                      # <-- fix: was an undefined name

    # ---- 1) K|V projection (once per sequence position, not per query tile)
    kv = pl.pallas_call(
        kv_proj_kernel,
        out_shape=jax.ShapeDtypeStruct((B, S, 2 * H), compute_dtype),
        grid_spec=pltpu.PrefetchScalarGridSpec(
            num_scalar_prefetch=0,
            grid=(B, n_s),
            in_specs=[
                pl.BlockSpec((1, s_tile, D), lambda b, s: (b, s, 0)),
                _const_spec((D, 2 * H)),
                _const_spec((1, 2 * H)),
            ],
            out_specs=pl.BlockSpec((1, s_tile, 2 * H), lambda b, s: (b, s, 0)),
        ),
        compiler_params=pltpu.CompilerParams(
            dimension_semantics=("parallel", "parallel"),
            vmem_limit_bytes=vmem_bytes),
        cost_estimate=pl.CostEstimate(
            flops=int(2 * B * S * D * 2 * H),
            transcendentals=0,
            bytes_accessed=int(x.size * x.dtype.itemsize
                               + D * 2 * H * itemsize
                               + B * S * 2 * H * itemsize)),
    )(x, wkv, bkv)

    # Per-head layout (B, heads, S, dh): one-time XLA relayout, so the
    # attention kernel never lane-splits K/V per key step.
    k4 = kv[..., :H].reshape(B, S, num_heads, head_dim).transpose(0, 2, 1, 3)
    v4 = kv[..., H:].reshape(B, S, num_heads, head_dim).transpose(0, 2, 1, 3)

    # ---- 2) flash-style attention + dense + residual + LayerNorm ----
    kernel = partial(attention_kernel,
                     num_heads=num_heads, head_dim=head_dim, eps=eps)

    flops = int(2 * B * S * D * H            # Q projection
                + 4 * B * S * S * H          # scores + context
                + 2 * B * S * H * H)         # output dense
    bytes_accessed = int(x.size * x.dtype.itemsize
                         + 2 * B * S * H * itemsize            # K + V
                         + (D * H + H * H) * itemsize          # weights
                         + B * S * H * x.dtype.itemsize)       # output

    return pl.pallas_call(
        kernel,
        out_shape=jax.ShapeDtypeStruct((B, S, H), x.dtype),
        grid_spec=pltpu.PrefetchScalarGridSpec(
            num_scalar_prefetch=0,
            grid=(B, n_q, n_k),
            in_specs=[
                pl.BlockSpec((1, q_tile, D), lambda b, q, k: (b, q, 0)),
                pl.BlockSpec((1, num_heads, k_tile, head_dim),
                             lambda b, q, k: (b, 0, k, 0)),
                pl.BlockSpec((1, num_heads, k_tile, head_dim),
                             lambda b, q, k: (b, 0, k, 0)),
                _const_spec((D, H)), _const_spec((1, H)),       # query (scaled)
                _const_spec((H, H)), _const_spec((1, H)),       # dense
                _const_spec((1, H)), _const_spec((1, H)),       # layernorm
            ],
            out_specs=pl.BlockSpec((1, q_tile, H), lambda b, q, k: (b, q, 0)),
            scratch_shapes=[
                pltpu.VMEM((num_heads, q_tile, head_dim), compute_dtype),  # q
                pltpu.VMEM((num_heads, q_tile, 1), jnp.float32),           # m
                pltpu.VMEM((num_heads, q_tile, 1), jnp.float32),           # l
                pltpu.VMEM((num_heads, q_tile, head_dim), jnp.float32),    # acc
            ],
        ),
        compiler_params=pltpu.CompilerParams(
            # batch & query tiles parallel (megacore / 2 TCs on v7x),
            # key axis is the online-softmax reduction.
            dimension_semantics=("parallel", "parallel", "arbitrary"),
            # Flash tiling keeps live VMEM ~TQ*TK, so 48 MiB fits v7x's 64 MiB
            # physical VMEM with headroom; raise on v5e/v6e for bigger tiles.
            vmem_limit_bytes=vmem_bytes),
        cost_estimate=pl.CostEstimate(
            flops=flops,
            transcendentals=int(B * num_heads * S * S),
            bytes_accessed=bytes_accessed),
    )(x, k4, v4, wq, bq, wd, bd, params["ln_w"], params["ln_b"])


# ---------------------------------------------------------------------------
# Parameters / pure-JAX reference / demo
# ---------------------------------------------------------------------------
def init_params(key, in_dim, hid_dim):
    """Deterministic synthetic parameters (shapes match the nn.Module)."""
    ks = jax.random.split(key, 8)
    scale = 1.0 / math.sqrt(in_dim)

    def lin(kw, kb, fan_in, fan_out):
        w = jax.random.uniform(kw, (fan_in, fan_out), jnp.float32, -scale, scale)
        b = jax.random.uniform(kb, (1, fan_out), jnp.float32, -scale, scale)
        return w, b

    wq, bq = lin(ks[0], ks[1], in_dim, hid_dim)
    wk, bk = lin(ks[2], ks[3], in_dim, hid_dim)
    wv, bv = lin(ks[4], ks[5], in_dim, hid_dim)
    wd, bd = lin(ks[6], ks[7], hid_dim, hid_dim)
    return dict(
        wq=wq, bq=bq, wk=wk, bk=bk, wv=wv, bv=bv, wd=wd, bd=bd,
        ln_w=jnp.ones((1, hid_dim), jnp.float32),
        ln_b=jnp.zeros((1, hid_dim), jnp.float32),
    )


def reference(x, params, *, num_heads):
    """Pure-JAX reference mirroring the PyTorch forward (eval mode)."""
    B, S, D = x.shape
    H = params["wq"].shape[1]
    dh = H // num_heads
    q = x @ params["wq"] + params["bq"]
    k = x @ params["wk"] + params["bk"]
    v = x @ params["wv"] + params["bv"]
    tr = lambda t: t.reshape(B, S, num_heads, dh).transpose(0, 2, 1, 3)
    q, k, v = tr(q), tr(k), tr(v)
    scores = jnp.einsum("bhqd,bhkd->bhqk", q, k) / math.sqrt(dh)
    probs = jax.nn.softmax(scores, axis=-1)
    ctx = jnp.einsum("bhqk,bhkd->bhqd", probs, v)
    ctx = ctx.transpose(0, 2, 1, 3).reshape(B, S, H)
    hid = ctx @ params["wd"] + params["bd"] + x
    u = hid.mean(-1, keepdims=True)
    s = ((hid - u) ** 2).mean(-1, keepdims=True)
    return params["ln_w"] * ((hid - u) / jnp.sqrt(s + 1e-12)) + params["ln_b"]


if __name__ == "__main__":
    B, S, D = 2, 8, 32        # batch, seq, in_dim == hid_dim
    num_heads = 4

    key = jax.random.PRNGKey(0)
    kx, kp = jax.random.split(key)
    x = jax.random.normal(kx, (B, S, D), jnp.float32)
    params = init_params(kp, D, D)

    ref = reference(x, params, num_heads=num_heads)

    # f32 MXU path (tolerance covers the approx EUP reciprocal in softmax).
    out = jax.block_until_ready(self_attention(x, params, num_heads=num_heads))
    assert out.shape == (B, S, D)
    err = float(jnp.max(jnp.abs(out - ref)))
    assert err < 5e-3, f"f32 path error {err}"

    # bf16 MXU fast path (all generations): f32 accumulation/softmax/LayerNorm.
    out_bf16 = jax.block_until_ready(
        self_attention(x, params, num_heads=num_heads,
                       compute_dtype=jnp.bfloat16))
    err_bf16 = float(jnp.max(jnp.abs(out_bf16 - ref)))
    assert err_bf16 < 5e-2, f"bf16 path error {err_bf16}"

    print("KERNEL_OK")
</pallas_src>

<mosaic_0001>
module attributes {stable_mosaic.version = 11 : i64} {
  func.func @kv_proj_kernel(%arg0: i32, %arg1: i32, %arg2: memref<1x8x32xf32, #tpu.memory_space<vmem>>, %arg3: memref<32x64xf32, #tpu.memory_space<vmem>>, %arg4: memref<1x64xf32, #tpu.memory_space<vmem>>, %arg5: memref<1x8x64xf32, #tpu.memory_space<vmem>>) attributes {dimension_semantics = [#tpu.dimension_semantics<parallel>, #tpu.dimension_semantics<parallel>], iteration_bounds = array<i64: 2, 1>, scalar_prefetch = 0 : i64, scratch_operands = 0 : i64, tpu.core_type = #tpu.core_type<tc>, window_params = [{transform_indices = @transform_0, window_bounds = array<i64: 1, 8, 32>}, {pipeline_mode = #tpu.pipeline_mode<synchronous>, transform_indices = @transform_1, window_bounds = array<i64: 32, 64>}, {pipeline_mode = #tpu.pipeline_mode<synchronous>, transform_indices = @transform_2, window_bounds = array<i64: 1, 64>}, {transform_indices = @transform_3, window_bounds = array<i64: 1, 8, 64>}]} {
    %c0 = arith.constant 0 : index
    %c0_0 = arith.constant 0 : index
    %c0_1 = arith.constant 0 : index
    %0 = vector.load %arg2[%c0, %c0_0, %c0_1] : memref<1x8x32xf32, #tpu.memory_space<vmem>>, vector<1x8x32xf32>
    %1 = vector.shape_cast %0 : vector<1x8x32xf32> to vector<8x32xf32>
    %c0_2 = arith.constant 0 : index
    %c0_3 = arith.constant 0 : index
    %2 = vector.load %arg3[%c0_2, %c0_3] : memref<32x64xf32, #tpu.memory_space<vmem>>, vector<32x64xf32>
    %cst = arith.constant dense<0.000000e+00> : vector<8x64xf32>
    %3 = tpu.matmul %1, %2, %cst {dimension_numbers = #tpu.dot_dimension_numbers<[1], [0], [0], [1], [0, 0, 1, 1], [], []>} : vector<8x32xf32>, vector<32x64xf32>, vector<8x64xf32> -> vector<8x64xf32>
    %c0_4 = arith.constant 0 : index
    %c0_5 = arith.constant 0 : index
    %4 = vector.load %arg4[%c0_4, %c0_5] : memref<1x64xf32, #tpu.memory_space<vmem>>, vector<1x64xf32>
    %5 = vector.broadcast %4 : vector<1x64xf32> to vector<8x64xf32>
    %6 = arith.addf %3, %5 : vector<8x64xf32>
    %c0_6 = arith.constant 0 : index
    %c0_7 = arith.constant 0 : index
    %c0_8 = arith.constant 0 : index
    %7 = vector.load %arg5[%c0_6, %c0_7, %c0_8] : memref<1x8x64xf32, #tpu.memory_space<vmem>>, vector<1x8x64xf32>
    %8 = vector.shape_cast %7 : vector<1x8x64xf32> to vector<8x64xf32>
    %9 = vector.shape_cast %6 : vector<8x64xf32> to vector<1x8x64xf32>
    tpu.vector_store %arg5[%c0_6, %c0_7, %c0_8], %9 {strides = array<i32>} : memref<1x8x64xf32, #tpu.memory_space<vmem>>, vector<1x8x64xf32>,
    return
  }
  func.func @transform_0(%arg0: i32, %arg1: i32) -> (i32, i32, i32) {
    %c0_i32 = arith.constant 0 : i32
    %c0_i32_0 = arith.constant 0 : i32
    return %arg0, %arg1, %c0_i32 : i32, i32, i32
  }
  func.func @transform_1(%arg0: i32, %arg1: i32) -> (i32, i32) {
    %c0_i32 = arith.constant 0 : i32
    %c0_i32_0 = arith.constant 0 : i32
    %c0_i32_1 = arith.constant 0 : i32
    return %c0_i32, %c0_i32_0 : i32, i32
  }
  func.func @transform_2(%arg0: i32, %arg1: i32) -> (i32, i32) {
    %c0_i32 = arith.constant 0 : i32
    %c0_i32_0 = arith.constant 0 : i32
    %c0_i32_1 = arith.constant 0 : i32
    return %c0_i32, %c0_i32_0 : i32, i32
  }
  func.func @transform_3(%arg0: i32, %arg1: i32) -> (i32, i32, i32) {
    %c0_i32 = arith.constant 0 : i32
    %c0_i32_0 = arith.constant 0 : i32
    return %arg0, %arg1, %c0_i32 : i32, i32, i32
  }
}

module attributes {stable_mosaic.version = 11 : i64} {
  func.func @attention_kernel(%arg0: i32, %arg1: i32, %arg2: i32, %arg3: memref<1x8x32xf32, #tpu.memory_space<vmem>>, %arg4: memref<1x4x8x8xf32, #tpu.memory_space<vmem>>, %arg5: memref<1x4x8x8xf32, #tpu.memory_space<vmem>>, %arg6: memref<32x32xf32, #tpu.memory_space<vmem>>, %arg7: memref<1x32xf32, #tpu.memory_space<vmem>>, %arg8: memref<32x32xf32, #tpu.memory_space<vmem>>, %arg9: memref<1x32xf32, #tpu.memory_space<vmem>>, %arg10: memref<1x32xf32, #tpu.memory_space<vmem>>, %arg11: memref<1x32xf32, #tpu.memory_space<vmem>>, %arg12: memref<1x8x32xf32, #tpu.memory_space<vmem>>, %arg13: memref<4x8x8xf32, #tpu.memory_space<vmem>>, %arg14: memref<4x8x1xf32, #tpu.memory_space<vmem>>, %arg15: memref<4x8x1xf32, #tpu.memory_space<vmem>>, %arg16: memref<4x8x8xf32, #tpu.memory_space<vmem>>) attributes {dimension_semantics = [#tpu.dimension_semantics<parallel>, #tpu.dimension_semantics<parallel>, #tpu.dimension_semantics<arbitrary>], iteration_bounds = array<i64: 2, 1, 1>, scalar_prefetch = 0 : i64, scratch_operands = 4 : i64, tpu.core_type = #tpu.core_type<tc>, window_params = [{transform_indices = @transform_0, window_bounds = array<i64: 1, 8, 32>}, {transform_indices = @transform_1, window_bounds = array<i64: 1, 4, 8, 8>}, {transform_indices = @transform_2, window_bounds = array<i64: 1, 4, 8, 8>}, {pipeline_mode = #tpu.pipeline_mode<synchronous>, transform_indices = @transform_3, window_bounds = array<i64: 32, 32>}, {pipeline_mode = #tpu.pipeline_mode<synchronous>, transform_indices = @transform_4, window_bounds = array<i64: 1, 32>}, {pipeline_mode = #tpu.pipeline_mode<synchronous>, transform_indices = @transform_5, window_bounds = array<i64: 32, 32>}, {pipeline_mode = #tpu.pipeline_mode<synchronous>, transform_indices = @transform_6, window_bounds = array<i64: 1, 32>}, {pipeline_mode = #tpu.pipeline_mode<synchronous>, transform_indices = @transform_7, window_bounds = array<i64: 1, 32>}, {pipeline_mode = #tpu.pipeline_mode<synchronous>, transform_indices = @transform_8, window_bounds = array<i64: 1, 32>}, {transform_indices = @transform_9, window_bounds = array<i64: 1, 8, 32>}]} {
    %c0_i32 = arith.constant 0 : i32
    %0 = arith.cmpi eq, %arg2, %c0_i32 : i32
    %1 = arith.extui %0 : i1 to i32
    %c0_i32_0 = arith.constant 0 : i32
    %2 = arith.cmpi ne, %1, %c0_i32_0 : i32
    scf.if %2 {
      %c0_37 = arith.constant 0 : index
      %c0_38 = arith.constant 0 : index
      %c0_39 = arith.constant 0 : index
      %35 = vector.load %arg3[%c0_37, %c0_38, %c0_39] : memref<1x8x32xf32, #tpu.memory_space<vmem>>, vector<1x8x32xf32>
      %36 = vector.shape_cast %35 : vector<1x8x32xf32> to vector<8x32xf32>
      %c0_40 = arith.constant 0 : index
      %c0_41 = arith.constant 0 : index
      %37 = vector.load %arg6[%c0_40, %c0_41] : memref<32x32xf32, #tpu.memory_space<vmem>>, vector<32x32xf32>
      %cst_42 = arith.constant dense<0.000000e+00> : vector<8x32xf32>
      %38 = tpu.matmul %36, %37, %cst_42 {dimension_numbers = #tpu.dot_dimension_numbers<[1], [0], [0], [1], [0, 0, 1, 1], [], []>} : vector<8x32xf32>, vector<32x32xf32>, vector<8x32xf32> -> vector<8x32xf32>
      %c0_43 = arith.constant 0 : index
      %c0_44 = arith.constant 0 : index
      %39 = vector.load %arg7[%c0_43, %c0_44] : memref<1x32xf32, #tpu.memory_space<vmem>>, vector<1x32xf32>
      %40 = vector.broadcast %39 : vector<1x32xf32> to vector<8x32xf32>
      %41 = arith.addf %38, %40 : vector<8x32xf32>
      %42 = vector.shape_cast %41 : vector<8x32xf32> to vector<8x4x8xf32>
      %43 = tpu.transpose %42, [1, 0, 2] : vector<8x4x8xf32> -> vector<4x8x8xf32>
      %c0_45 = arith.constant 0 : index
      %c0_46 = arith.constant 0 : index
      %c0_47 = arith.constant 0 : index
      %44 = vector.load %arg13[%c0_45, %c0_46, %c0_47] : memref<4x8x8xf32, #tpu.memory_space<vmem>>, vector<4x8x8xf32>
      tpu.vector_store %arg13[%c0_45, %c0_46, %c0_47], %43 {strides = array<i32>} : memref<4x8x8xf32, #tpu.memory_space<vmem>>, vector<4x8x8xf32>,
      %cst_48 = arith.constant 0xFF800000 : f32
      %45 = vector.broadcast %cst_48 : f32 to vector<4x8x1xf32>
      %c0_49 = arith.constant 0 : index
      %c0_50 = arith.constant 0 : index
      %c0_51 = arith.constant 0 : index
      %46 = vector.load %arg14[%c0_49, %c0_50, %c0_51] : memref<4x8x1xf32, #tpu.memory_space<vmem>>, vector<4x8x1xf32>
      tpu.vector_store %arg14[%c0_49, %c0_50, %c0_51], %45 {strides = array<i32>} : memref<4x8x1xf32, #tpu.memory_space<vmem>>, vector<4x8x1xf32>,
      %cst_52 = arith.constant 0.000000e+00 : f32
      %47 = vector.broadcast %cst_52 : f32 to vector<4x8x1xf32>
      %c0_53 = arith.constant 0 : index
      %c0_54 = arith.constant 0 : index
      %c0_55 = arith.constant 0 : index
      %48 = vector.load %arg15[%c0_53, %c0_54, %c0_55] : memref<4x8x1xf32, #tpu.memory_space<vmem>>, vector<4x8x1xf32>
      tpu.vector_store %arg15[%c0_53, %c0_54, %c0_55], %47 {strides = array<i32>} : memref<4x8x1xf32, #tpu.memory_space<vmem>>, vector<4x8x1xf32>,
      %cst_56 = arith.constant 0.000000e+00 : f32
      %49 = vector.broadcast %cst_56 : f32 to vector<4x8x8xf32>
      %c0_57 = arith.constant 0 : index
      %c0_58 = arith.constant 0 : index
      %c0_59 = arith.constant 0 : index
      %50 = vector.load %arg16[%c0_57, %c0_58, %c0_59] : memref<4x8x8xf32, #tpu.memory_space<vmem>>, vector<4x8x8xf32>
      tpu.vector_store %arg16[%c0_57, %c0_58, %c0_59], %49 {strides = array<i32>} : memref<4x8x8xf32, #tpu.memory_space<vmem>>, vector<4x8x8xf32>,
    } else {
    }
    %c0 = arith.constant 0 : index
    %c0_1 = arith.constant 0 : index
    %c0_2 = arith.constant 0 : index
    %c0_3 = arith.constant 0 : index
    %3 = vector.load %arg4[%c0, %c0_1, %c0_2, %c0_3] : memref<1x4x8x8xf32, #tpu.memory_space<vmem>>, vector<1x4x8x8xf32>
    %4 = vector.shape_cast %3 : vector<1x4x8x8xf32> to vector<4x8x8xf32>
    %c0_4 = arith.constant 0 : index
    %c0_5 = arith.constant 0 : index
    %c0_6 = arith.constant 0 : index
    %c0_7 = arith.constant 0 : index
    %5 = vector.load %arg5[%c0_4, %c0_5, %c0_6, %c0_7] : memref<1x4x8x8xf32, #tpu.memory_space<vmem>>, vector<1x4x8x8xf32>
    %6 = vector.shape_cast %5 : vector<1x4x8x8xf32> to vector<4x8x8xf32>
    %c0_8 = arith.constant 0 : index
    %c0_9 = arith.constant 0 : index
    %c0_10 = arith.constant 0 : index
    %7 = vector.load %arg13[%c0_8, %c0_9, %c0_10] : memref<4x8x8xf32, #tpu.memory_space<vmem>>, vector<4x8x8xf32>
    "tpu.trace_start"() <{level = 10 : i32, message = "nqd,nkd->nqk"}> : () -> ()
    %cst = arith.constant dense<0.000000e+00> : vector<4x8x8xf32>
    %8 = tpu.matmul %7, %4, %cst {dimension_numbers = #tpu.dot_dimension_numbers<[2], [2], [1], [1], [0, 0, 0, 1, 1, 1], [0], [0]>} : vector<4x8x8xf32>, vector<4x8x8xf32>, vector<4x8x8xf32> -> vector<4x8x8xf32>
    "tpu.trace_stop"() : () -> ()
    %c0_11 = arith.constant 0 : index
    %c0_12 = arith.constant 0 : index
    %c0_13 = arith.constant 0 : index
    %9 = vector.load %arg14[%c0_11, %c0_12, %c0_13] : memref<4x8x1xf32, #tpu.memory_space<vmem>>, vector<4x8x1xf32>
    %cst_14 = arith.constant dense<0xFF800000> : vector<4x8xf32>
    %10 = vector.multi_reduction <maximumf>, %8, %cst_14 [2] : vector<4x8x8xf32> to vector<4x8xf32>
    %11 = vector.shape_cast %10 : vector<4x8xf32> to vector<4x8x1xf32>
    %12 = arith.maximumf %9, %11 : vector<4x8x1xf32>
    %c0_15 = arith.constant 0 : index
    %c0_16 = arith.constant 0 : index
    %c0_17 = arith.constant 0 : index
    %13 = vector.load %arg14[%c0_15, %c0_16, %c0_17] : memref<4x8x1xf32, #tpu.memory_space<vmem>>, vector<4x8x1xf32>
    %14 = arith.subf %13, %12 : vector<4x8x1xf32>
    %15 = math.exp %14 : vector<4x8x1xf32>
    %16 = vector.broadcast %12 : vector<4x8x1xf32> to vector<4x8x8xf32>
    %17 = arith.subf %8, %16 : vector<4x8x8xf32>
    %18 = math.exp %17 : vector<4x8x8xf32>
    %c0_18 = arith.constant 0 : index
    %c0_19 = arith.constant 0 : index
    %c0_20 = arith.constant 0 : index
    %19 = vector.load %arg15[%c0_18, %c0_19, %c0_20] : memref<4x8x1xf32, #tpu.memory_space<vmem>>, vector<4x8x1xf32>
    %20 = arith.mulf %15, %19 : vector<4x8x1xf32>
    %cst_21 = arith.constant dense<0.000000e+00> : vector<4x8xf32>
    %21 = vector.multi_reduction <add>, %18, %cst_21 [2] : vector<4x8x8xf32> to vector<4x8xf32>
    %22 = vector.shape_cast %21 : vector<4x8xf32> to vector<4x8x1xf32>
    %23 = arith.addf %20, %22 : vector<4x8x1xf32>
    %c0_22 = arith.constant 0 : index
    %c0_23 = arith.constant 0 : index
    %c0_24 = arith.constant 0 : index
    %24 = vector.load %arg15[%c0_22, %c0_23, %c0_24] : memref<4x8x1xf32, #tpu.memory_space<vmem>>, vector<4x8x1xf32>
    tpu.vector_store %arg15[%c0_22, %c0_23, %c0_24], %23 {strides = array<i32>} : memref<4x8x1xf32, #tpu.memory_space<vmem>>, vector<4x8x1xf32>,
    %c0_25 = arith.constant 0 : index
    %c0_26 = arith.constant 0 : index
    %c0_27 = arith.constant 0 : index
    %25 = vector.load %arg16[%c0_25, %c0_26, %c0_27] : memref<4x8x8xf32, #tpu.memory_space<vmem>>, vector<4x8x8xf32>
    %26 = vector.broadcast %15 : vector<4x8x1xf32> to vector<4x8x8xf32>
    %27 = arith.mulf %26, %25 : vector<4x8x8xf32>
    "tpu.trace_start"() <{level = 10 : i32, message = "nqk,nkd->nqd"}> : () -> ()
    %cst_28 = arith.constant dense<0.000000e+00> : vector<4x8x8xf32>
    %28 = tpu.matmul %18, %6, %cst_28 {dimension_numbers = #tpu.dot_dimension_numbers<[2], [1], [1], [2], [0, 0, 0, 1, 1, 2], [0], [0]>} : vector<4x8x8xf32>, vector<4x8x8xf32>, vector<4x8x8xf32> -> vector<4x8x8xf32>
    "tpu.trace_stop"() : () -> ()
    %29 = arith.addf %27, %28 : vector<4x8x8xf32>
    %c0_29 = arith.constant 0 : index
    %c0_30 = arith.constant 0 : index
    %c0_31 = arith.constant 0 : index
    %30 = vector.load %arg16[%c0_29, %c0_30, %c0_31] : memref<4x8x8xf32, #tpu.memory_space<vmem>>, vector<4x8x8xf32>
    tpu.vector_store %arg16[%c0_29, %c0_30, %c0_31], %29 {strides = array<i32>} : memref<4x8x8xf32, #tpu.memory_space<vmem>>, vector<4x8x8xf32>,
    %c0_32 = arith.constant 0 : index
    %c0_33 = arith.constant 0 : index
    %c0_34 = arith.constant 0 : index
    %31 = vector.load %arg14[%c0_32, %c0_33, %c0_34] : memref<4x8x1xf32, #tpu.memory_space<vmem>>, vector<4x8x1xf32>
    tpu.vector_store %arg14[%c0_32, %c0_33, %c0_34], %12 {strides = array<i32>} : memref<4x8x1xf32, #tpu.memory_space<vmem>>, vector<4x8x1xf32>,
    %c0_i32_35 = arith.constant 0 : i32
    %32 = arith.cmpi eq, %arg2, %c0_i32_35 : i32
    %33 = arith.extui %32 : i1 to i32
    %c0_i32_36 = arith.constant 0 : i32
    %34 = arith.cmpi ne, %33, %c0_i32_36 : i32
    scf.if %34 {
      %c0_37 = arith.constant 0 : index
      %c0_38 = arith.constant 0 : index
      %c0_39 = arith.constant 0 : index
      %35 = vector.load %arg16[%c0_37, %c0_38, %c0_39] : memref<4x8x8xf32, #tpu.memory_space<vmem>>, vector<4x8x8xf32>
      %c0_40 = arith.constant 0 : index
      %c0_41 = arith.constant 0 : index
      %c0_42 = arith.constant 0 : index
      %36 = vector.load %arg15[%c0_40, %c0_41, %c0_42] : memref<4x8x1xf32, #tpu.memory_space<vmem>>, vector<4x8x1xf32>
      %37 = tpu.reciprocal %36 {approx = true} : vector<4x8x1xf32> -> vector<4x8x1xf32>
      %38 = vector.broadcast %37 : vector<4x8x1xf32> to vector<4x8x8xf32>
      %39 = arith.mulf %35, %38 : vector<4x8x8xf32>
      %40 = tpu.transpose %39, [1, 0, 2] : vector<4x8x8xf32> -> vector<8x4x8xf32>
      %41 = vector.shape_cast %40 : vector<8x4x8xf32> to vector<8x32xf32>
      %c0_43 = arith.constant 0 : index
      %c0_44 = arith.constant 0 : index
      %42 = vector.load %arg8[%c0_43, %c0_44] : memref<32x32xf32, #tpu.memory_space<vmem>>, vector<32x32xf32>
      %cst_45 = arith.constant dense<0.000000e+00> : vector<8x32xf32>
      %43 = tpu.matmul %41, %42, %cst_45 {dimension_numbers = #tpu.dot_dimension_numbers<[1], [0], [0], [1], [0, 0, 1, 1], [], []>} : vector<8x32xf32>, vector<32x32xf32>, vector<8x32xf32> -> vector<8x32xf32>
      %c0_46 = arith.constant 0 : index
      %c0_47 = arith.constant 0 : index
      %44 = vector.load %arg9[%c0_46, %c0_47] : memref<1x32xf32, #tpu.memory_space<vmem>>, vector<1x32xf32>
      %45 = vector.broadcast %44 : vector<1x32xf32> to vector<8x32xf32>
      %46 = arith.addf %43, %45 : vector<8x32xf32>
      %c0_48 = arith.constant 0 : index
      %c0_49 = arith.constant 0 : index
      %c0_50 = arith.constant 0 : index
      %47 = vector.load %arg3[%c0_48, %c0_49, %c0_50] : memref<1x8x32xf32, #tpu.memory_space<vmem>>, vector<1x8x32xf32>
      %48 = vector.shape_cast %47 : vector<1x8x32xf32> to vector<8x32xf32>
      %49 = arith.addf %46, %48 : vector<8x32xf32>
      %cst_51 = arith.constant dense<0.000000e+00> : vector<8xf32>
      %50 = vector.multi_reduction <add>, %49, %cst_51 [1] : vector<8x32xf32> to vector<8xf32>
      %51 = vector.shape_cast %50 : vector<8xf32> to vector<8x1xf32>
      %cst_52 = arith.constant 3.200000e+01 : f32
      %52 = vector.broadcast %cst_52 : f32 to vector<8x1xf32>
      %53 = arith.divf %51, %52 : vector<8x1xf32>
      %54 = vector.broadcast %53 : vector<8x1xf32> to vector<8x32xf32>
      %55 = arith.subf %49, %54 : vector<8x32xf32>
      %56 = arith.mulf %55, %55 : vector<8x32xf32>
      %cst_53 = arith.constant dense<0.000000e+00> : vector<8xf32>
      %57 = vector.multi_reduction <add>, %56, %cst_53 [1] : vector<8x32xf32> to vector<8xf32>
      %58 = vector.shape_cast %57 : vector<8xf32> to vector<8x1xf32>
      %cst_54 = arith.constant 3.200000e+01 : f32
      %59 = vector.broadcast %cst_54 : f32 to vector<8x1xf32>
      %60 = arith.divf %58, %59 : vector<8x1xf32>
      %c0_55 = arith.constant 0 : index
      %c0_56 = arith.constant 0 : index
      %61 = vector.load %arg10[%c0_55, %c0_56] : memref<1x32xf32, #tpu.memory_space<vmem>>, vector<1x32xf32>
      %cst_57 = arith.constant 9.99999996E-13 : f32
      %62 = vector.broadcast %cst_57 : f32 to vector<8x1xf32>
      %63 = arith.addf %60, %62 : vector<8x1xf32>
      %64 = math.rsqrt %63 : vector<8x1xf32>
      %65 = vector.broadcast %64 : vector<8x1xf32> to vector<8x32xf32>
      %66 = arith.mulf %55, %65 : vector<8x32xf32>
      %67 = vector.broadcast %61 : vector<1x32xf32> to vector<8x32xf32>
      %68 = arith.mulf %67, %66 : vector<8x32xf32>
      %c0_58 = arith.constant 0 : index
      %c0_59 = arith.constant 0 : index
      %69 = vector.load %arg11[%c0_58, %c0_59] : memref<1x32xf32, #tpu.memory_space<vmem>>, vector<1x32xf32>
      %70 = vector.broadcast %69 : vector<1x32xf32> to vector<8x32xf32>
      %71 = arith.addf %68, %70 : vector<8x32xf32>
      %c0_60 = arith.constant 0 : index
      %c0_61 = arith.constant 0 : index
      %c0_62 = arith.constant 0 : index
      %72 = vector.load %arg12[%c0_60, %c0_61, %c0_62] : memref<1x8x32xf32, #tpu.memory_space<vmem>>, vector<1x8x32xf32>
      %73 = vector.shape_cast %72 : vector<1x8x32xf32> to vector<8x32xf32>
      %74 = vector.shape_cast %71 : vector<8x32xf32> to vector<1x8x32xf32>
      tpu.vector_store %arg12[%c0_60, %c0_61, %c0_62], %74 {strides = array<i32>} : memref<1x8x32xf32, #tpu.memory_space<vmem>>, vector<1x8x32xf32>,
    } else {
    }
    return
  }
  func.func @transform_0(%arg0: i32, %arg1: i32, %arg2: i32) -> (i32, i32, i32) {
    %c0_i32 = arith.constant 0 : i32
    %c0_i32_0 = arith.constant 0 : i32
    return %arg0, %arg1, %c0_i32 : i32, i32, i32
  }
  func.func @transform_1(%arg0: i32, %arg1: i32, %arg2: i32) -> (i32, i32, i32, i32) {
    %c0_i32 = arith.constant 0 : i32
    %c0_i32_0 = arith.constant 0 : i32
    %c0_i32_1 = arith.constant 0 : i32
    return %arg0, %c0_i32, %arg2, %c0_i32_0 : i32, i32, i32, i32
  }
  func.func @transform_2(%arg0: i32, %arg1: i32, %arg2: i32) -> (i32, i32, i32, i32) {
    %c0_i32 = arith.constant 0 : i32
    %c0_i32_0 = arith.constant 0 : i32
    %c0_i32_1 = arith.constant 0 : i32
    return %arg0, %c0_i32, %arg2, %c0_i32_0 : i32, i32, i32, i32
  }
  func.func @transform_3(%arg0: i32, %arg1: i32, %arg2: i32) -> (i32, i32) {
    %c0_i32 = arith.constant 0 : i32
    %c0_i32_0 = arith.constant 0 : i32
    %c0_i32_1 = arith.constant 0 : i32
    return %c0_i32, %c0_i32_0 : i32, i32
  }
  func.func @transform_4(%arg0: i32, %arg1: i32, %arg2: i32) -> (i32, i32) {
    %c0_i32 = arith.constant 0 : i32
    %c0_i32_0 = arith.constant 0 : i32
    %c0_i32_1 = arith.constant 0 : i32
    return %c0_i32, %c0_i32_0 : i32, i32
  }
  func.func @transform_5(%arg0: i32, %arg1: i32, %arg2: i32) -> (i32, i32) {
    %c0_i32 = arith.constant 0 : i32
    %c0_i32_0 = arith.constant 0 : i32
    %c0_i32_1 = arith.constant 0 : i32
    return %c0_i32, %c0_i32_0 : i32, i32
  }
  func.func @transform_6(%arg0: i32, %arg1: i32, %arg2: i32) -> (i32, i32) {
    %c0_i32 = arith.constant 0 : i32
    %c0_i32_0 = arith.constant 0 : i32
    %c0_i32_1 = arith.constant 0 : i32
    return %c0_i32, %c0_i32_0 : i32, i32
  }
  func.func @transform_7(%arg0: i32, %arg1: i32, %arg2: i32) -> (i32, i32) {
    %c0_i32 = arith.constant 0 : i32
    %c0_i32_0 = arith.constant 0 : i32
    %c0_i32_1 = arith.constant 0 : i32
    return %c0_i32, %c0_i32_0 : i32, i32
  }
  func.func @transform_8(%arg0: i32, %arg1: i32, %arg2: i32) -> (i32, i32) {
    %c0_i32 = arith.constant 0 : i32
    %c0_i32_0 = arith.constant 0 : i32
    %c0_i32_1 = arith.constant 0 : i32
    return %c0_i32, %c0_i32_0 : i32, i32
  }
  func.func @transform_9(%arg0: i32, %arg1: i32, %arg2: i32) -> (i32, i32, i32) {
    %c0_i32 = arith.constant 0 : i32
    %c0_i32_0 = arith.constant 0 : i32
    return %arg0, %arg1, %c0_i32 : i32, i32, i32
  }
}

</mosaic_0001>

<llo_original>
// kernel: self_attention.2
$region0: #{self_attention.2}
  #allocation0 [shape = 'u32[]', space=smem, size = 0x4, offset = 0x4, fixed_abs, tag = 'smem constant byte address 0x4 - core index']
  #allocation1 [shape = 'u32[72,128]{1,0:T(1,128)}', space=vmem, size = 0x9000, scoped, tag = 'internal scratch']
  %s0 = inlined_call_operand.vmem [shape: f32[2,8,32], index: 0, kind: input, shape index: {}]
  %s1 = inlined_call_operand.vmem [shape: f32[32,64], index: 1, kind: input, shape index: {}]
  %s2 = inlined_call_operand.vmem [shape: f32[1,64], index: 2, kind: input, shape index: {}]
  %s3 = inlined_call_operand.vmem [shape: f32[2,8,64], index: 3, kind: output, shape index: {}]
  %s4 = sld [smem:[#allocation0]]
  $region45: #{self_attention.2} parent=0
    _
  %s6 = ssub.s32 1, %s4
  %s7 = scalar_select 0, %s6, %s4
  loop: start=0, step=1, limit=4
  $region2: #{self_attention.2} parent=0 // loop_pre_header
    _
  $region3: #{self_attention.2} parent=0 // loop_header
    %s9 = sphi 0, %s13
    %p10 = scmp.ge.s32.totalorder %s9, 4
    %s16 = sphi 0, %s28
    %s17 = sphi 0, %s24
    %s18 = sphi 0, %s16
    %s19 = sphi 0, %s17
    %s20 = sphi 0, %s18
    %s21 = sphi 0, %s19
    %s33 = sphi 0, %s35
    %s36 = sphi 0, %s33
    %s37 = sphi 0, %s36
    %s53 = sphi 0, %s37
    %s57 = sphi 0, %s57
    %s59 = sphi 0, %s57
    %s60 = sphi 0, %s59
    %s74 = sphi 0, %s60
    %s78 = sphi 0, %s78
    %s80 = sphi 0, %s78
    %s81 = sphi 0, %s80
    %s95 = sphi 0, %s81
    %s103 = sphi 0, %s105
    %s106 = sphi 0, %s103
    %s107 = sphi 0, %s106
    %s123 = sphi 0, %s107
  $region4: #{self_attention.2} parent=0 // loop_header_branch
    %12 = sbr.rel (%p10) target = $region8
  $region5: #{self_attention.2} parent=0 // loop_body
    %s14 = ssub.s32 %s9, 1
    %s15 = ssub.s32 %s9, 2
    %s22 = sadd.s32 1, %s17
    %p23 = scmp.ge.s32.totalorder %s22, 1
    %s24 = scalar_select %p23, 0, %s22
    %s25 = sadd.s32 1, %s16
    %s26 = scalar_select %p23, %s25, %s16
    %p27 = scmp.ge.s32.totalorder %s26, 2
    %s28 = scalar_select %p27, 0, %s26
    %s29 = ssub.s32 %s16, %s28
    %s30 = ssub.s32 %s17, %s24
    %s31 = sor.u32 %s29, %s30
    %p32 = scmp.eq.s32.totalorder %s31, 0
    %s34 = sadd.s32 %s33, 1
    %s35 = scalar_select %p32, %s33, %s34
    %p38 = pneg %p32
    %p39 = scmp.eq.s32.totalorder %s9, 1
    %p40 = por %p38, %p39
    %p41 = scmp.ne.s32.totalorder %s33, %s36
    %p42 = scmp.eq.s32.totalorder %s9, 0
    %p43 = por %p41, %p42
    %p44 = scmp.ne.s32.totalorder %s33, %s36
    %p45 = scmp.eq.s32.totalorder %s14, 1
    %p46 = por %p44, %p45
    %p47 = scmp.ne.s32.totalorder %s36, %s37
    %p48 = scmp.eq.s32.totalorder %s14, 0
    %p49 = por %p47, %p48
    %p50 = scmp.ne.s32.totalorder %s36, %s37
    %p51 = scmp.eq.s32.totalorder %s15, 1
    %p52 = por %p50, %p51
    %p54 = scmp.ne.s32.totalorder %s37, %s53
    %p55 = scmp.eq.s32.totalorder %s15, 0
    %p56 = por %p54, %p55
    %s58 = sadd.s32 %s57, 1
    %p61 = scmp.eq.s32.totalorder %s9, 1
    %p62 = scmp.ne.s32.totalorder %s57, %s59
    %p63 = scmp.eq.s32.totalorder %s9, 0
    %p64 = por %p62, %p63
    %p65 = scmp.ne.s32.totalorder %s57, %s59
    %p66 = scmp.eq.s32.totalorder %s14, 1
    %p67 = por %p65, %p66
    %p68 = scmp.ne.s32.totalorder %s59, %s60
    %p69 = scmp.eq.s32.totalorder %s14, 0
    %p70 = por %p68, %p69
    %p71 = scmp.ne.s32.totalorder %s59, %s60
    %p72 = scmp.eq.s32.totalorder %s15, 1
    %p73 = por %p71, %p72
    %p75 = scmp.ne.s32.totalorder %s60, %s74
    %p76 = scmp.eq.s32.totalorder %s15, 0
    %p77 = por %p75, %p76
    %s79 = sadd.s32 %s78, 1
    %p82 = scmp.eq.s32.totalorder %s9, 1
    %p83 = scmp.ne.s32.totalorder %s78, %s80
    %p84 = scmp.eq.s32.totalorder %s9, 0
    %p85 = por %p83, %p84
    %p86 = scmp.ne.s32.totalorder %s78, %s80
    %p87 = scmp.eq.s32.totalorder %s14, 1
    %p88 = por %p86, %p87
    %p89 = scmp.ne.s32.totalorder %s80, %s81
    %p90 = scmp.eq.s32.totalorder %s14, 0
    %p91 = por %p89, %p90
    %p92 = scmp.ne.s32.totalorder %s80, %s81
    %p93 = scmp.eq.s32.totalorder %s15, 1
    %p94 = por %p92, %p93
    %p96 = scmp.ne.s32.totalorder %s81, %s95
    %p97 = scmp.eq.s32.totalorder %s15, 0
    %p98 = por %p96, %p97
    %s99 = ssub.s32 %s16, %s28
    %s100 = ssub.s32 %s17, %s24
    %s101 = sor.u32 %s99, %s100
    %p102 = scmp.eq.s32.totalorder %s101, 0
    %s104 = sadd.s32 %s103, 1
    %s105 = scalar_select %p102, %s103, %s104
    %p108 = pneg %p102
    %p109 = scmp.eq.s32.totalorder %s9, 1
    %p110 = por %p108, %p109
    %p111 = scmp.ne.s32.totalorder %s103, %s106
    %p112 = scmp.eq.s32.totalorder %s9, 0
    %p113 = por %p111, %p112
    %p114 = scmp.ne.s32.totalorder %s103, %s106
    %p115 = scmp.eq.s32.totalorder %s14, 1
    %p116 = por %p114, %p115
    %p117 = scmp.ne.s32.totalorder %s106, %s107
    %p118 = scmp.eq.s32.totalorder %s14, 0
    %p119 = por %p117, %p118
    %p120 = scmp.ne.s32.totalorder %s106, %s107
    %p121 = scmp.eq.s32.totalorder %s15, 1
    %p122 = por %p120, %p121
    %p124 = scmp.ne.s32.totalorder %s107, %s123
    %p125 = scmp.eq.s32.totalorder %s15, 0
    %p126 = por %p124, %p125
    %p127 = scmp.le.s32.totalorder 1, %s9
    %p128 = scmp.lt.s32.totalorder %s9, 3
    %p129 = pnand %p127, %p128
    %p130 = pneg %p129
    // Predicated region
    $region9: #{self_attention.2} parent=5 // pred_check
      _
    $region10: #{self_attention.2} parent=5 // pred_check_branch
      %132 = sbr.rel (%p129) target = $region12
    $region11: #{self_attention.2} parent=5 // pred_region
      %s133 = ssub.s32 %s9, 1
      // Predicated region
      $region13: #{self_attention.2} parent=11 // pred_check
        %p134 = pneg %p70
      $region14: #{self_attention.2} parent=11 // pred_check_branch
        %136 = sbr.rel (%p134) target = $region16
      $region15: #{self_attention.2} parent=11 // pred_region
        _
      $region16: #{self_attention.2} parent=11 // pred_fallthru
        _
      // Predicated region
      $region17: #{self_attention.2} parent=11 // pred_check
        %p137 = pneg %p91
      $region18: #{self_attention.2} parent=11 // pred_check_branch
        %139 = sbr.rel (%p137) target = $region20
      $region19: #{self_attention.2} parent=11 // pred_region
        _
      $region20: #{self_attention.2} parent=11 // pred_fallthru
        _
    $region12: #{self_attention.2} parent=5 // pred_fallthru
      _
    %p140 = scmp.lt.s32.totalorder %s9, 2
    // Predicated region
    $region21: #{self_attention.2} parent=5 // pred_check
      %p141 = pneg %p140
    $region22: #{self_attention.2} parent=5 // pred_check_branch
      %143 = sbr.rel (%p141) target = $region24
    $region23: #{self_attention.2} parent=5 // pred_region
      // Predicated region
      $region25: #{self_attention.2} parent=23 // pred_check
        %p144 = pneg %p43
      $region26: #{self_attention.2} parent=23 // pred_check_branch
        %146 = sbr.rel (%p144) target = $region28
      $region27: #{self_attention.2} parent=23 // pred_region
        %p147 = scmp.lt.s32.totalorder %s16, 1
        %s148 = scalar_select %p147, %s16, 1
        %p149 = scmp.lt.s32.totalorder %s17, 0
        %s150 = scalar_select %p149, %s17, 0
        %s151 = sadd.s32 %s150, %s148
        %s152 = smul.addr %s151, 8
        %s153 = scalar_lea.vmem %s0, %s152
      $region28: #{self_attention.2} parent=23 // pred_fallthru
        _
    $region24: #{self_attention.2} parent=5 // pred_fallthru
      _
    %p154 = scmp.le.s32.totalorder 1, %s9
    %p155 = scmp.lt.s32.totalorder %s9, 3
    %p156 = pnand %p154, %p155
    %p157 = pneg %p156
    // Predicated region
    $region29: #{self_attention.2} parent=5 // pred_check
      _
    $region30: #{self_attention.2} parent=5 // pred_check_branch
      %159 = sbr.rel (%p156) target = $region32
    $region31: #{self_attention.2} parent=5 // pred_region
      %s160 = ssub.s32 %s9, 1
      %p161 = scmp.lt.s32.totalorder %s18, 1
      %s162 = scalar_select %p161, %s18, 1
      %p163 = scmp.lt.s32.totalorder %s19, 0
      %s164 = scalar_select %p163, %s19, 0
      %s165 = sadd.s32 %s164, %s162
      %s166 = smul.addr %s165, 8
      %s167 = scalar_lea.vmem %s0, %s166
      %p168 = pneg %p49
      %p169 = pneg %p46
      %p170 = pneg %p70
      %p171 = pneg %p67
      %p172 = pneg %p91
      %p173 = pneg %p88
      %p174 = pneg %p119
      %p175 = pneg %p116
      %p176 = scmp.lt.s32.totalorder %s18, 1
      %s177 = scalar_select %p176, %s18, 1
      %p178 = scmp.lt.s32.totalorder %s19, 0
      %s179 = scalar_select %p178, %s19, 0
      %s180 = sadd.s32 %s179, %s177
      %s181 = smul.addr %s180, 8
      %s182 = scalar_lea.vmem %s3, %s181
      %p183 = scmp.lt.s32.totalorder %s18, 1
      %s184 = scalar_select %p183, %s18, 1
      %p185 = scmp.lt.s32.totalorder %s19, 0
      %s186 = scalar_select %p185, %s19, 0
      %s187 = sadd.s32 %s186, %s184
      %s188 = smul.addr %s187, 8
      %s189 = scalar_lea.vmem %s0, %s188
      %p190 = scmp.lt.s32.totalorder %s18, 1
      %s191 = scalar_select %p190, %s18, 1
      %p192 = scmp.lt.s32.totalorder %s19, 0
      %s193 = scalar_select %p192, %s19, 0
      %s194 = sadd.s32 %s193, %s191
      %s195 = smul.addr %s194, 8
      %s196 = scalar_lea.vmem %s3, %s195
      %v197 = vld [vmem:[%s189] sm:$0xff]
      %v198 = vld [vmem:[%s1] sm:$0xff]
      %v199 = vld [vmem:[%s1 + $0x8] sm:$0xff]
      %v200 = vld [vmem:[%s1 + $0x10] sm:$0xff]
      %v201 = vld [vmem:[%s1 + $0x18] sm:$0xff]
      %v202 = vld [vmem:[%s2] sm:$0x1]
      %v204 = vperm.slane %v202, 0
      %vm206 = vcmask 261120
      %v208 = vsel %vm206, %v197, 0
      %210 = vmatpush.msra.mxu0 0.0
      %211 = vmatpush.msra.mxu0 0.0
      %212 = vmatpush.msra.mxu0 0.0
      %213 = vmatpush.msra.mxu0 0.0
      %214 = vmatpush.msra.mxu0 0.0
      %215 = vmatpush.msra.mxu0 0.0
      %216 = vmatpush.msra.mxu0 0.0
      %217 = vmatpush.msra.mxu0 0.0
      %218 = vmatpush.msra.mxu0 0.0
      %219 = vmatpush.msra.mxu0 0.0
      %220 = vmatpush.msra.mxu0 0.0
      %221 = vmatpush.msra.mxu0 0.0
      %222 = vmatpush.msra.mxu0 %v201
      %223 = vmatpush.msra.mxu0 %v200
      %224 = vmatpush.msra.mxu0 %v199
      %225 = vmatpush.msra.mxu0 %v198
      %226 = vmatmul.f32.gmra.mxu0 %v208
      %v227 = vpop.f32.mrf.mxu0
      %v228 = vadd.f32 %v204, %v227
      %229 = vdwg.mxu0
      %vm230 = vcmask 523264
      %231 = vst.msk [vmem:[%s196] sm:$0xff] %vm230, %v228
      %p232 = scmp.lt.s32.totalorder %s18, 1
      %s233 = scalar_select %p232, %s18, 1
      %p234 = scmp.lt.s32.totalorder %s19, 0
      %s235 = scalar_select %p234, %s19, 0
      %s236 = sadd.s32 %s235, %s233
      %s237 = smul.addr %s236, 8
      %s238 = scalar_lea.vmem %s3, %s237
      // Predicated region
      $region33: #{self_attention.2} parent=31 // pred_check
        %p239 = pneg %p116
      $region34: #{self_attention.2} parent=31 // pred_check_branch
        %241 = sbr.rel (%p239) target = $region36
      $region35: #{self_attention.2} parent=31 // pred_region
        _
      $region36: #{self_attention.2} parent=31 // pred_fallthru
        _
    $region32: #{self_attention.2} parent=5 // pred_fallthru
      _
    %p242 = scmp.le.s32.totalorder 2, %s9
    // Predicated region
    $region37: #{self_attention.2} parent=5 // pred_check
      %p243 = pneg %p242
    $region38: #{self_attention.2} parent=5 // pred_check_branch
      %245 = sbr.rel (%p243) target = $region40
    $region39: #{self_attention.2} parent=5 // pred_region
      %s246 = ssub.s32 %s9, 2
      // Predicated region
      $region41: #{self_attention.2} parent=39 // pred_check
        %p247 = pneg %p122
      $region42: #{self_attention.2} parent=39 // pred_check_branch
        %249 = sbr.rel (%p247) target = $region44
      $region43: #{self_attention.2} parent=39 // pred_region
        %p250 = scmp.lt.s32.totalorder %s20, 1
        %s251 = scalar_select %p250, %s20, 1
        %p252 = scmp.lt.s32.totalorder %s21, 0
        %s253 = scalar_select %p252, %s21, 0
        %s254 = sadd.s32 %s253, %s251
        %s255 = smul.addr %s254, 8
        %s256 = scalar_lea.vmem %s3, %s255
      $region44: #{self_attention.2} parent=39 // pred_fallthru
        _
    $region40: #{self_attention.2} parent=5 // pred_fallthru
      _
  $region6: #{self_attention.2} parent=0 // loop_footer
    %s13 = sadd.s32 1, %s9
  $region7: #{self_attention.2} parent=0 // loop_footer_branch
    %8 = sbr.rel target = $region3
  $region8: #{self_attention.2} parent=0 // loop_exit
    _

// kernel: self_attention.3
$region0: #{self_attention.3}
  #allocation0 [shape = 'u32[]', space=smem, size = 0x4, offset = 0x4, fixed_abs, tag = 'smem constant byte address 0x4 - core index']
  #allocation1 [shape = 'u32[72,128]{1,0:T(1,128)}', space=vmem, size = 0x9000, scoped, tag = 'internal scratch']
  #allocation2 [shape = 'f32[4,8,8]{2,1,0:T(8,128)}', space=vmem, size = 0x4000, scoped, tag = 'scratch operand']
  #allocation3 [shape = 'f32[4,8,1]{2,1,0:T(8,128)}', space=vmem, size = 0x4000, scoped, tag = 'scratch operand']
  #allocation4 [shape = 'f32[4,8,1]{2,1,0:T(8,128)}', space=vmem, size = 0x4000, scoped, tag = 'scratch operand']
  #allocation5 [shape = 'f32[4,8,8]{2,1,0:T(8,128)}', space=vmem, size = 0x4000, scoped, tag = 'scratch operand']
  %s0 = inlined_call_operand.vmem [shape: f32[2,8,32], index: 0, kind: input, shape index: {}]
  %s1 = inlined_call_operand.vmem [shape: f32[2,4,8,8], index: 1, kind: input, shape index: {}]
  %s2 = inlined_call_operand.vmem [shape: f32[2,4,8,8], index: 2, kind: input, shape index: {}]
  %s3 = inlined_call_operand.vmem [shape: f32[32,32], index: 3, kind: input, shape index: {}]
  %s4 = inlined_call_operand.vmem [shape: f32[1,32], index: 4, kind: input, shape index: {}]
  %s5 = inlined_call_operand.vmem [shape: f32[32,32], index: 5, kind: input, shape index: {}]
  %s6 = inlined_call_operand.vmem [shape: f32[1,32], index: 6, kind: input, shape index: {}]
  %s7 = inlined_call_operand.vmem [shape: f32[1,32], index: 7, kind: input, shape index: {}]
  %s8 = inlined_call_operand.vmem [shape: f32[1,32], index: 8, kind: input, shape index: {}]
  %s9 = inlined_call_operand.hbm [shape: f32[2,8,32], index: 9, kind: output, shape index: {}]
  %s10 = sld [smem:[#allocation0]]
  $region77: #{self_attention.3} parent=0
    _
  %s12 = ssub.s32 1, %s10
  %s13 = scalar_select 0, %s12, %s10
  $region1: #{self_attention.3} parent=0
    #allocation6 [shape = 'u8[8192]{0}', space=vmem, size = 0x2000, scoped, tag = 'output window, operand 0']
    #allocation7 [shape = 's32[2]{0}', space=sflag, size = 0x8, scoped, tag = 'scoped memory for self_attention.3']
    %14 = vsyncpa [#allocation7], 0
    %s15 = scalar_lea.sflag [#allocation7], 1
    %16 = vsyncpa %s15, 0
    loop: start=0, step=1, limit=4
    $region2: #{self_attention.3} parent=1 // loop_pre_header
      _
    $region3: #{self_attention.3} parent=1 // loop_header
      %s18 = sphi 0, %s22
      %p19 = scmp.ge.s32.totalorder %s18, 4
      %s25 = sphi 0, %s44
      %s26 = sphi 0, %s40
      %s27 = sphi 0, %s36
      %s28 = sphi 0, %s25
      %s29 = sphi 0, %s26
      %s30 = sphi 0, %s27
      %s31 = sphi 0, %s28
      %s32 = sphi 0, %s29
      %s33 = sphi 0, %s30
      %s49 = sphi 0, %s51
      %s52 = sphi 0, %s49
      %s53 = sphi 0, %s52
      %s69 = sphi 0, %s53
      %s77 = sphi 0, %s79
      %s80 = sphi 0, %s77
      %s81 = sphi 0, %s80
      %s97 = sphi 0, %s81
      %s105 = sphi 0, %s107
      %s108 = sphi 0, %s105
      %s109 = sphi 0, %s108
      %s125 = sphi 0, %s109
      %s129 = sphi 0, %s129
      %s131 = sphi 0, %s129
      %s132 = sphi 0, %s131
      %s146 = sphi 0, %s132
      %s150 = sphi 0, %s150
      %s152 = sphi 0, %s150
      %s153 = sphi 0, %s152
      %s167 = sphi 0, %s153
      %s171 = sphi 0, %s171
      %s173 = sphi 0, %s171
      %s174 = sphi 0, %s173
      %s188 = sphi 0, %s174
      %s192 = sphi 0, %s192
      %s194 = sphi 0, %s192
      %s195 = sphi 0, %s194
      %s209 = sphi 0, %s195
      %s213 = sphi 0, %s213
      %s215 = sphi 0, %s213
      %s216 = sphi 0, %s215
      %s230 = sphi 0, %s216
      %s234 = sphi 0, %s234
      %s236 = sphi 0, %s234
      %s237 = sphi 0, %s236
      %s251 = sphi 0, %s237
      %s259 = sphi 0, %s261
      %s262 = sphi 0, %s259
      %s263 = sphi 0, %s262
      %s279 = sphi 0, %s263
    $region4: #{self_attention.3} parent=1 // loop_header_branch
      %21 = sbr.rel (%p19) target = $region8
    $region5: #{self_attention.3} parent=1 // loop_body
      %s23 = ssub.s32 %s18, 1
      %s24 = ssub.s32 %s18, 2
      %s34 = sadd.s32 1, %s27
      %p35 = scmp.ge.s32.totalorder %s34, 1
      %s36 = scalar_select %p35, 0, %s34
      %s37 = sadd.s32 1, %s26
      %s38 = scalar_select %p35, %s37, %s26
      %p39 = scmp.ge.s32.totalorder %s38, 1
      %s40 = scalar_select %p39, 0, %s38
      %s41 = sadd.s32 1, %s25
      %s42 = scalar_select %p39, %s41, %s25
      %p43 = scmp.ge.s32.totalorder %s42, 2
      %s44 = scalar_select %p43, 0, %s42
      %s45 = ssub.s32 %s25, %s44
      %s46 = ssub.s32 %s26, %s40
      %s47 = sor.u32 %s45, %s46
      %p48 = scmp.eq.s32.totalorder %s47, 0
      %s50 = sadd.s32 %s49, 1
      %s51 = scalar_select %p48, %s49, %s50
      %p54 = pneg %p48
      %p55 = scmp.eq.s32.totalorder %s18, 1
      %p56 = por %p54, %p55
      %p57 = scmp.ne.s32.totalorder %s49, %s52
      %p58 = scmp.eq.s32.totalorder %s18, 0
      %p59 = por %p57, %p58
      %p60 = scmp.ne.s32.totalorder %s49, %s52
      %p61 = scmp.eq.s32.totalorder %s23, 1
      %p62 = por %p60, %p61
      %p63 = scmp.ne.s32.totalorder %s52, %s53
      %p64 = scmp.eq.s32.totalorder %s23, 0
      %p65 = por %p63, %p64
      %p66 = scmp.ne.s32.totalorder %s52, %s53
      %p67 = scmp.eq.s32.totalorder %s24, 1
      %p68 = por %p66, %p67
      %p70 = scmp.ne.s32.totalorder %s53, %s69
      %p71 = scmp.eq.s32.totalorder %s24, 0
      %p72 = por %p70, %p71
      %s73 = ssub.s32 %s25, %s44
      %s74 = ssub.s32 %s27, %s36
      %s75 = sor.u32 %s73, %s74
      %p76 = scmp.eq.s32.totalorder %s75, 0
      %s78 = sadd.s32 %s77, 1
      %s79 = scalar_select %p76, %s77, %s78
      %p82 = pneg %p76
      %p83 = scmp.eq.s32.totalorder %s18, 1
      %p84 = por %p82, %p83
      %p85 = scmp.ne.s32.totalorder %s77, %s80
      %p86 = scmp.eq.s32.totalorder %s18, 0
      %p87 = por %p85, %p86
      %p88 = scmp.ne.s32.totalorder %s77, %s80
      %p89 = scmp.eq.s32.totalorder %s23, 1
      %p90 = por %p88, %p89
      %p91 = scmp.ne.s32.totalorder %s80, %s81
      %p92 = scmp.eq.s32.totalorder %s23, 0
      %p93 = por %p91, %p92
      %p94 = scmp.ne.s32.totalorder %s80, %s81
      %p95 = scmp.eq.s32.totalorder %s24, 1
      %p96 = por %p94, %p95
      %p98 = scmp.ne.s32.totalorder %s81, %s97
      %p99 = scmp.eq.s32.totalorder %s24, 0
      %p100 = por %p98, %p99
      %s101 = ssub.s32 %s25, %s44
      %s102 = ssub.s32 %s27, %s36
      %s103 = sor.u32 %s101, %s102
      %p104 = scmp.eq.s32.totalorder %s103, 0
      %s106 = sadd.s32 %s105, 1
      %s107 = scalar_select %p104, %s105, %s106
      %p110 = pneg %p104
      %p111 = scmp.eq.s32.totalorder %s18, 1
      %p112 = por %p110, %p111
      %p113 = scmp.ne.s32.totalorder %s105, %s108
      %p114 = scmp.eq.s32.totalorder %s18, 0
      %p115 = por %p113, %p114
      %p116 = scmp.ne.s32.totalorder %s105, %s108
      %p117 = scmp.eq.s32.totalorder %s23, 1
      %p118 = por %p116, %p117
      %p119 = scmp.ne.s32.totalorder %s108, %s109
      %p120 = scmp.eq.s32.totalorder %s23, 0
      %p121 = por %p119, %p120
      %p122 = scmp.ne.s32.totalorder %s108, %s109
      %p123 = scmp.eq.s32.totalorder %s24, 1
      %p124 = por %p122, %p123
      %p126 = scmp.ne.s32.totalorder %s109, %s125
      %p127 = scmp.eq.s32.totalorder %s24, 0
      %p128 = por %p126, %p127
      %s130 = sadd.s32 %s129, 1
      %p133 = scmp.eq.s32.totalorder %s18, 1
      %p134 = scmp.ne.s32.totalorder %s129, %s131
      %p135 = scmp.eq.s32.totalorder %s18, 0
      %p136 = por %p134, %p135
      %p137 = scmp.ne.s32.totalorder %s129, %s131
      %p138 = scmp.eq.s32.totalorder %s23, 1
      %p139 = por %p137, %p138
      %p140 = scmp.ne.s32.totalorder %s131, %s132
      %p141 = scmp.eq.s32.totalorder %s23, 0
      %p142 = por %p140, %p141
      %p143 = scmp.ne.s32.totalorder %s131, %s132
      %p144 = scmp.eq.s32.totalorder %s24, 1
      %p145 = por %p143, %p144
      %p147 = scmp.ne.s32.totalorder %s132, %s146
      %p148 = scmp.eq.s32.totalorder %s24, 0
      %p149 = por %p147, %p148
      %s151 = sadd.s32 %s150, 1
      %p154 = scmp.eq.s32.totalorder %s18, 1
      %p155 = scmp.ne.s32.totalorder %s150, %s152
      %p156 = scmp.eq.s32.totalorder %s18, 0
      %p157 = por %p155, %p156
      %p158 = scmp.ne.s32.totalorder %s150, %s152
      %p159 = scmp.eq.s32.totalorder %s23, 1
      %p160 = por %p158, %p159
      %p161 = scmp.ne.s32.totalorder %s152, %s153
      %p162 = scmp.eq.s32.totalorder %s23, 0
      %p163 = por %p161, %p162
      %p164 = scmp.ne.s32.totalorder %s152, %s153
      %p165 = scmp.eq.s32.totalorder %s24, 1
      %p166 = por %p164, %p165
      %p168 = scmp.ne.s32.totalorder %s153, %s167
      %p169 = scmp.eq.s32.totalorder %s24, 0
      %p170 = por %p168, %p169
      %s172 = sadd.s32 %s171, 1
      %p175 = scmp.eq.s32.totalorder %s18, 1
      %p176 = scmp.ne.s32.totalorder %s171, %s173
      %p177 = scmp.eq.s32.totalorder %s18, 0
      %p178 = por %p176, %p177
      %p179 = scmp.ne.s32.totalorder %s171, %s173
      %p180 = scmp.eq.s32.totalorder %s23, 1
      %p181 = por %p179, %p180
      %p182 = scmp.ne.s32.totalorder %s173, %s174
      %p183 = scmp.eq.s32.totalorder %s23, 0
      %p184 = por %p182, %p183
      %p185 = scmp.ne.s32.totalorder %s173, %s174
      %p186 = scmp.eq.s32.totalorder %s24, 1
      %p187 = por %p185, %p186
      %p189 = scmp.ne.s32.totalorder %s174, %s188
      %p190 = scmp.eq.s32.totalorder %s24, 0
      %p191 = por %p189, %p190
      %s193 = sadd.s32 %s192, 1
      %p196 = scmp.eq.s32.totalorder %s18, 1
      %p197 = scmp.ne.s32.totalorder %s192, %s194
      %p198 = scmp.eq.s32.totalorder %s18, 0
      %p199 = por %p197, %p198
      %p200 = scmp.ne.s32.totalorder %s192, %s194
      %p201 = scmp.eq.s32.totalorder %s23, 1
      %p202 = por %p200, %p201
      %p203 = scmp.ne.s32.totalorder %s194, %s195
      %p204 = scmp.eq.s32.totalorder %s23, 0
      %p205 = por %p203, %p204
      %p206 = scmp.ne.s32.totalorder %s194, %s195
      %p207 = scmp.eq.s32.totalorder %s24, 1
      %p208 = por %p206, %p207
      %p210 = scmp.ne.s32.totalorder %s195, %s209
      %p211 = scmp.eq.s32.totalorder %s24, 0
      %p212 = por %p210, %p211
      %s214 = sadd.s32 %s213, 1
      %p217 = scmp.eq.s32.totalorder %s18, 1
      %p218 = scmp.ne.s32.totalorder %s213, %s215
      %p219 = scmp.eq.s32.totalorder %s18, 0
      %p220 = por %p218, %p219
      %p221 = scmp.ne.s32.totalorder %s213, %s215
      %p222 = scmp.eq.s32.totalorder %s23, 1
      %p223 = por %p221, %p222
      %p224 = scmp.ne.s32.totalorder %s215, %s216
      %p225 = scmp.eq.s32.totalorder %s23, 0
      %p226 = por %p224, %p225
      %p227 = scmp.ne.s32.totalorder %s215, %s216
      %p228 = scmp.eq.s32.totalorder %s24, 1
      %p229 = por %p227, %p228
      %p231 = scmp.ne.s32.totalorder %s216, %s230
      %p232 = scmp.eq.s32.totalorder %s24, 0
      %p233 = por %p231, %p232
      %s235 = sadd.s32 %s234, 1
      %p238 = scmp.eq.s32.totalorder %s18, 1
      %p239 = scmp.ne.s32.totalorder %s234, %s236
      %p240 = scmp.eq.s32.totalorder %s18, 0
      %p241 = por %p239, %p240
      %p242 = scmp.ne.s32.totalorder %s234, %s236
      %p243 = scmp.eq.s32.totalorder %s23, 1
      %p244 = por %p242, %p243
      %p245 = scmp.ne.s32.totalorder %s236, %s237
      %p246 = scmp.eq.s32.totalorder %s23, 0
      %p247 = por %p245, %p246
      %p248 = scmp.ne.s32.totalorder %s236, %s237
      %p249 = scmp.eq.s32.totalorder %s24, 1
      %p250 = por %p248, %p249
      %p252 = scmp.ne.s32.totalorder %s237, %s251
      %p253 = scmp.eq.s32.totalorder %s24, 0
      %p254 = por %p252, %p253
      %s255 = ssub.s32 %s25, %s44
      %s256 = ssub.s32 %s26, %s40
      %s257 = sor.u32 %s255, %s256
      %p258 = scmp.eq.s32.totalorder %s257, 0
      %s260 = sadd.s32 %s259, 1
      %s261 = scalar_select %p258, %s259, %s260
      %p264 = pneg %p258
      %p265 = scmp.eq.s32.totalorder %s18, 1
      %p266 = por %p264, %p265
      %p267 = scmp.ne.s32.totalorder %s259, %s262
      %p268 = scmp.eq.s32.totalorder %s18, 0
      %p269 = por %p267, %p268
      %p270 = scmp.ne.s32.totalorder %s259, %s262
      %p271 = scmp.eq.s32.totalorder %s23, 1
      %p272 = por %p270, %p271
      %p273 = scmp.ne.s32.totalorder %s262, %s263
      %p274 = scmp.eq.s32.totalorder %s23, 0
      %p275 = por %p273, %p274
      %p276 = scmp.ne.s32.totalorder %s262, %s263
      %p277 = scmp.eq.s32.totalorder %s24, 1
      %p278 = por %p276, %p277
      %p280 = scmp.ne.s32.totalorder %s263, %s279
      %p281 = scmp.eq.s32.totalorder %s24, 0
      %p282 = por %p280, %p281
      %p283 = scmp.le.s32.totalorder 1, %s18
      %p284 = scmp.lt.s32.totalorder %s18, 3
      %p285 = pnand %p283, %p284
      %p286 = pneg %p285
      // Predicated region
      $region9: #{self_attention.3} parent=5 // pred_check
        _
      $region10: #{self_attention.3} parent=5 // pred_check_branch
        %288 = sbr.rel (%p285) target = $region12
      $region11: #{self_attention.3} parent=5 // pred_region
        %s289 = ssub.s32 %s18, 1
        // Predicated region
        $region13: #{self_attention.3} parent=11 // pred_check
          %p290 = pneg %p142
        $region14: #{self_attention.3} parent=11 // pred_check_branch
          %292 = sbr.rel (%p290) target = $region16
        $region15: #{self_attention.3} parent=11 // pred_region
          _
        $region16: #{self_attention.3} parent=11 // pred_fallthru
          _
        // Predicated region
        $region17: #{self_attention.3} parent=11 // pred_check
          %p293 = pneg %p163
        $region18: #{self_attention.3} parent=11 // pred_check_branch
          %295 = sbr.rel (%p293) target = $region20
        $region19: #{self_attention.3} parent=11 // pred_region
          _
        $region20: #{self_attention.3} parent=11 // pred_fallthru
          _
        // Predicated region
        $region21: #{self_attention.3} parent=11 // pred_check
          %p296 = pneg %p184
        $region22: #{self_attention.3} parent=11 // pred_check_branch
          %298 = sbr.rel (%p296) target = $region24
        $region23: #{self_attention.3} parent=11 // pred_region
          _
        $region24: #{self_attention.3} parent=11 // pred_fallthru
          _
        // Predicated region
        $region25: #{self_attention.3} parent=11 // pred_check
          %p299 = pneg %p205
        $region26: #{self_attention.3} parent=11 // pred_check_branch
          %301 = sbr.rel (%p299) target = $region28
        $region27: #{self_attention.3} parent=11 // pred_region
          _
        $region28: #{self_attention.3} parent=11 // pred_fallthru
          _
        // Predicated region
        $region29: #{self_attention.3} parent=11 // pred_check
          %p302 = pneg %p226
        $region30: #{self_attention.3} parent=11 // pred_check_branch
          %304 = sbr.rel (%p302) target = $region32
        $region31: #{self_attention.3} parent=11 // pred_region
          _
        $region32: #{self_attention.3} parent=11 // pred_fallthru
          _
        // Predicated region
        $region33: #{self_attention.3} parent=11 // pred_check
          %p305 = pneg %p247
        $region34: #{self_attention.3} parent=11 // pred_check_branch
          %307 = sbr.rel (%p305) target = $region36
        $region35: #{self_attention.3} parent=11 // pred_region
          _
        $region36: #{self_attention.3} parent=11 // pred_fallthru
          _
      $region12: #{self_attention.3} parent=5 // pred_fallthru
        _
      %p308 = scmp.lt.s32.totalorder %s18, 2
      // Predicated region
      $region37: #{self_attention.3} parent=5 // pred_check
        %p309 = pneg %p308
      $region38: #{self_attention.3} parent=5 // pred_check_branch
        %311 = sbr.rel (%p309) target = $region40
      $region39: #{self_attention.3} parent=5 // pred_region
        // Predicated region
        $region41: #{self_attention.3} parent=39 // pred_check
          %p312 = pneg %p59
        $region42: #{self_attention.3} parent=39 // pred_check_branch
          %314 = sbr.rel (%p312) target = $region44
        $region43: #{self_attention.3} parent=39 // pred_region
          %p315 = scmp.lt.s32.totalorder %s25, 1
          %s316 = scalar_select %p315, %s25, 1
          %p317 = scmp.lt.s32.totalorder %s26, 0
          %s318 = scalar_select %p317, %s26, 0
          %s319 = sadd.s32 %s318, %s316
          %s320 = smul.addr %s319, 8
          %s321 = scalar_lea.vmem %s0, %s320
        $region44: #{self_attention.3} parent=39 // pred_fallthru
          _
        // Predicated region
        $region45: #{self_attention.3} parent=39 // pred_check
          %p322 = pneg %p87
        $region46: #{self_attention.3} parent=39 // pred_check_branch
          %324 = sbr.rel (%p322) target = $region48
        $region47: #{self_attention.3} parent=39 // pred_region
          %p325 = scmp.lt.s32.totalorder %s25, 1
          %s326 = scalar_select %p325, %s25, 1
          %p327 = scmp.lt.s32.totalorder %s27, 0
          %s328 = scalar_select %p327, %s27, 0
          %s329 = smul.addr %s326, 4
          %s330 = sadd.s32 %s328, %s329
          %s331 = smul.addr %s330, 8
          %s332 = scalar_lea.vmem %s1, %s331
        $region48: #{self_attention.3} parent=39 // pred_fallthru
          _
        // Predicated region
        $region49: #{self_attention.3} parent=39 // pred_check
          %p333 = pneg %p115
        $region50: #{self_attention.3} parent=39 // pred_check_branch
          %335 = sbr.rel (%p333) target = $region52
        $region51: #{self_attention.3} parent=39 // pred_region
          %p336 = scmp.lt.s32.totalorder %s25, 1
          %s337 = scalar_select %p336, %s25, 1
          %p338 = scmp.lt.s32.totalorder %s27, 0
          %s339 = scalar_select %p338, %s27, 0
          %s340 = smul.addr %s337, 4
          %s341 = sadd.s32 %s339, %s340
          %s342 = smul.addr %s341, 8
          %s343 = scalar_lea.vmem %s2, %s342
        $region52: #{self_attention.3} parent=39 // pred_fallthru
          _
      $region40: #{self_attention.3} parent=5 // pred_fallthru
        _
      %p344 = scmp.le.s32.totalorder 1, %s18
      %p345 = scmp.lt.s32.totalorder %s18, 3
      %p346 = pnand %p344, %p345
      %p347 = pneg %p346
      // Predicated region
      $region53: #{self_attention.3} parent=5 // pred_check
        _
      $region54: #{self_attention.3} parent=5 // pred_check_branch
        %349 = sbr.rel (%p346) target = $region56
      $region55: #{self_attention.3} parent=5 // pred_region
        %s350 = ssub.s32 %s18, 1
        %p351 = scmp.lt.s32.totalorder %s28, 1
        %s352 = scalar_select %p351, %s28, 1
        %p353 = scmp.lt.s32.totalorder %s29, 0
        %s354 = scalar_select %p353, %s29, 0
        %s355 = sadd.s32 %s354, %s352
        %s356 = smul.addr %s355, 8
        %s357 = scalar_lea.vmem %s0, %s356
        %p358 = pneg %p65
        %p359 = pneg %p62
        %p360 = scmp.lt.s32.totalorder %s28, 1
        %s361 = scalar_select %p360, %s28, 1
        %p362 = scmp.lt.s32.totalorder %s30, 0
        %s363 = scalar_select %p362, %s30, 0
        %s364 = smul.addr %s361, 4
        %s365 = sadd.s32 %s363, %s364
        %s366 = smul.addr %s365, 8
        %s367 = scalar_lea.vmem %s1, %s366
        %p368 = pneg %p93
        %p369 = pneg %p90
        %p370 = scmp.lt.s32.totalorder %s28, 1
        %s371 = scalar_select %p370, %s28, 1
        %p372 = scmp.lt.s32.totalorder %s30, 0
        %s373 = scalar_select %p372, %s30, 0
        %s374 = smul.addr %s371, 4
        %s375 = sadd.s32 %s373, %s374
        %s376 = smul.addr %s375, 8
        %s377 = scalar_lea.vmem %s2, %s376
        %p378 = pneg %p121
        %p379 = pneg %p118
        %p380 = pneg %p142
        %p381 = pneg %p139
        %p382 = pneg %p163
        %p383 = pneg %p160
        %p384 = pneg %p184
        %p385 = pneg %p181
        %p386 = pneg %p205
        %p387 = pneg %p202
        %p388 = pneg %p226
        %p389 = pneg %p223
        %p390 = pneg %p247
        %p391 = pneg %p244
        %p392 = pneg %p275
        %p393 = pneg %p272
        %s394 = sand.u32 %s262, 1
        %s395 = scalar_lea.sflag [#allocation7], %s394
        %s396 = sand.u32 %s262, 1
        %s397 = smul.addr %s396, 8
        %s398 = scalar_lea.vmem [#allocation6], %s397
        %p399 = scmp.lt.s32.totalorder %s28, 1
        %s400 = scalar_select %p399, %s28, 1
        %p401 = scmp.lt.s32.totalorder %s29, 0
        %s402 = scalar_select %p401, %s29, 0
        %s403 = sadd.s32 %s402, %s400
        %s404 = smul.addr %s403, 8
        %s405 = scalar_lea.vmem %s0, %s404
        %p406 = scmp.lt.s32.totalorder %s28, 1
        %s407 = scalar_select %p406, %s28, 1
        %p408 = scmp.lt.s32.totalorder %s30, 0
        %s409 = scalar_select %p408, %s30, 0
        %s410 = smul.addr %s407, 4
        %s411 = sadd.s32 %s409, %s410
        %s412 = smul.addr %s411, 8
        %s413 = scalar_lea.vmem %s1, %s412
        %p414 = scmp.lt.s32.totalorder %s28, 1
        %s415 = scalar_select %p414, %s28, 1
        %p416 = scmp.lt.s32.totalorder %s30, 0
        %s417 = scalar_select %p416, %s30, 0
        %s418 = smul.addr %s415, 4
        %s419 = sadd.s32 %s417, %s418
        %s420 = smul.addr %s419, 8
        %s421 = scalar_lea.vmem %s2, %s420
        %p422 = scmp.eq.s32.totalorder %s30, 0
        // Predicated region
        $region57: #{self_attention.3} parent=55 // pred_check
          %p423 = pneg %p422
        $region58: #{self_attention.3} parent=55 // pred_check_branch
          %425 = sbr.rel (%p423) target = $region60
        $region59: #{self_attention.3} parent=55 // pred_region
          %v426 = vld [vmem:[%s405] sm:$0xff]
          %v427 = vld [vmem:[%s3] sm:$0xff]
          %v428 = vld [vmem:[%s3 + $0x8] sm:$0xff]
          %v429 = vld [vmem:[%s3 + $0x10] sm:$0xff]
          %v430 = vld [vmem:[%s3 + $0x18] sm:$0xff]
          %v431 = vld [vmem:[%s4] sm:$0x1]
          %v433 = vperm.slane %v431, 0
          %vm435 = vcmask 261120
          %v437 = vsel %vm435, %v426, 0
          %439 = vmatpush.msra.mxu0 0.0
          %440 = vmatpush.msra.mxu0 0.0
          %441 = vmatpush.msra.mxu0 0.0
          %442 = vmatpush.msra.mxu0 0.0
          %443 = vmatpush.msra.mxu0 0.0
          %444 = vmatpush.msra.mxu0 0.0
          %445 = vmatpush.msra.mxu0 0.0
          %446 = vmatpush.msra.mxu0 0.0
          %447 = vmatpush.msra.mxu0 0.0
          %448 = vmatpush.msra.mxu0 0.0
          %449 = vmatpush.msra.mxu0 0.0
          %450 = vmatpush.msra.mxu0 0.0
          %451 = vmatpush.msra.mxu0 %v430
          %452 = vmatpush.msra.mxu0 %v429
          %453 = vmatpush.msra.mxu0 %v428
          %454 = vmatpush.msra.mxu0 %v427
          %455 = vmatmul.f32.gmra.mxu0 %v437
          %v456 = vpop.f32.mrf.mxu0
          %v457 = vadd.f32 %v433, %v456
          %458 = vdwg.mxu0
          %460 = vrot.lane.b32.xlu0 %v457, 120
          %v461 = vpop.permute.xlu0 %460
          %463 = vrot.lane.b32.xlu0 %v457, 112
          %v464 = vpop.permute.xlu0 %463
          %466 = vrot.lane.b32.xlu0 %v457, 104
          %v467 = vpop.permute.xlu0 %466
          %v469 = vrot.slane %v464, 4
          %vm470 = vcmask 1047556
          %v471 = vsel %vm470, %v469, %v457
          %v472 = vrot.slane %v457, 4
          %v473 = vsel %vm470, %v464, %v472
          %v475 = vunpack.c.l.s4 1983009808
          %v476 = vunpack.c.0.s8 %v475
          %v477 = vperm.slane %v471, %v476
          %v479 = vunpack.c.l.s4 1983009808
          %v480 = vunpack.c.0.s8 %v479
          %v481 = vperm.slane %v473, %v480
          %v482 = vrot.slane %v467, 4
          %v483 = vsel %vm470, %v482, %v461
          %v484 = vrot.slane %v461, 4
          %v485 = vsel %vm470, %v467, %v484
          %v487 = vunpack.c.l.s4 1983009808
          %v488 = vunpack.c.0.s8 %v487
          %v489 = vperm.slane %v483, %v488
          %v491 = vunpack.c.l.s4 1983009808
          %v492 = vunpack.c.0.s8 %v491
          %v493 = vperm.slane %v485, %v492
          %v494 = vrot.slane %v489, 4
          %v495 = vsel %vm470, %v494, %v477
          %v496 = vrot.slane %v477, 4
          %v497 = vsel %vm470, %v489, %v496
          %v499 = vunpack.c.l.s4 1934713408
          %v500 = vunpack.c.0.s8 %v499
          %v501 = vperm.slane %v495, %v500
          %v503 = vunpack.c.l.s4 1934713408
          %v504 = vunpack.c.0.s8 %v503
          %v505 = vperm.slane %v497, %v504
          %v506 = vrot.slane %v493, 4
          %v507 = vsel %vm470, %v506, %v481
          %v508 = vrot.slane %v481, 4
          %v509 = vsel %vm470, %v493, %v508
          %v511 = vunpack.c.l.s4 1934713408
          %v512 = vunpack.c.0.s8 %v511
          %v513 = vperm.slane %v507, %v512
          %v515 = vunpack.c.l.s4 1934713408
          %v516 = vunpack.c.0.s8 %v515
          %v517 = vperm.slane %v509, %v516
          %v518 = vrot.slane %v501, 4
          %v519 = vsel %vm470, 0.0, %v518
          %v520 = vrot.slane %v505, 4
          %v521 = vsel %vm470, 0.0, %v520
          %v522 = vrot.slane %v513, 4
          %v523 = vsel %vm470, 0.0, %v522
          %v524 = vrot.slane %v517, 4
          %v525 = vsel %vm470, 0.0, %v524
          %v526 = vsel %vm470, %v520, %v501
          %v528 = vunpack.c.l.s4 1983009808
          %v529 = vunpack.c.0.s8 %v528
          %v530 = vperm.slane %v526, %v529
          %v531 = vrot.slane %v521, 4
          %v532 = vsel %vm470, %v531, %v519
          %v534 = vunpack.c.l.s4 1983009808
          %v535 = vunpack.c.0.s8 %v534
          %v536 = vperm.slane %v532, %v535
          %v537 = vsel %vm470, %v524, %v513
          %v539 = vunpack.c.l.s4 1983009808
          %v540 = vunpack.c.0.s8 %v539
          %v541 = vperm.slane %v537, %v540
          %v542 = vrot.slane %v525, 4
          %v543 = vsel %vm470, %v542, %v523
          %v545 = vunpack.c.l.s4 1983009808
          %v546 = vunpack.c.0.s8 %v545
          %v547 = vperm.slane %v543, %v546
          %v548 = vrot.slane %v536, 4
          %v549 = vsel %vm470, %v548, %v530
          %v550 = vrot.slane %v530, 4
          %v551 = vsel %vm470, %v536, %v550
          %v553 = vunpack.c.l.s4 1934713408
          %v554 = vunpack.c.0.s8 %v553
          %v555 = vperm.slane %v549, %v554
          %v557 = vunpack.c.l.s4 1934713408
          %v558 = vunpack.c.0.s8 %v557
          %v559 = vperm.slane %v551, %v558
          %v560 = vrot.slane %v547, 4
          %v561 = vsel %vm470, %v560, %v541
          %v562 = vrot.slane %v541, 4
          %v563 = vsel %vm470, %v547, %v562
          %v565 = vunpack.c.l.s4 1934713408
          %v566 = vunpack.c.0.s8 %v565
          %v567 = vperm.slane %v561, %v566
          %v569 = vunpack.c.l.s4 1934713408
          %v570 = vunpack.c.0.s8 %v569
          %v571 = vperm.slane %v563, %v570
          %v572 = vrot.slane %v567, 4
          %v573 = vsel %vm470, %v572, %v555
          %v574 = vrot.slane %v555, 4
          %v575 = vsel %vm470, %v567, %v574
          %v576 = vrot.slane %v571, 4
          %v577 = vsel %vm470, %v576, %v559
          %v578 = vrot.slane %v559, 4
          %v579 = vsel %vm470, %v571, %v578
          %vm580 = vcmask 64512
          %581 = vst.msk [vmem:[#allocation2] sm:$0xff] %vm580, %v573
          %582 = vst.msk [vmem:[#allocation2 + $0x8] sm:$0xff] %vm580, %v575
          %583 = vst.msk [vmem:[#allocation2 + $0x10] sm:$0xff] %vm580, %v577
          %584 = vst.msk [vmem:[#allocation2 + $0x18] sm:$0xff] %vm580, %v579
          %vm585 = vcmask 7168
          %586 = vst.msk [vmem:[#allocation3] sm:$0xff] %vm585, -inf
          %587 = vst.msk [vmem:[#allocation3 + $0x8] sm:$0xff] %vm585, -inf
          %588 = vst.msk [vmem:[#allocation3 + $0x10] sm:$0xff] %vm585, -inf
          %589 = vst.msk [vmem:[#allocation3 + $0x18] sm:$0xff] %vm585, -inf
          %590 = vst.msk [vmem:[#allocation4] sm:$0xff] %vm585, 0.0
          %591 = vst.msk [vmem:[#allocation4 + $0x8] sm:$0xff] %vm585, 0.0
          %592 = vst.msk [vmem:[#allocation4 + $0x10] sm:$0xff] %vm585, 0.0
          %593 = vst.msk [vmem:[#allocation4 + $0x18] sm:$0xff] %vm585, 0.0
          %594 = vst.msk [vmem:[#allocation5] sm:$0xff] %vm580, 0.0
          %595 = vst.msk [vmem:[#allocation5 + $0x8] sm:$0xff] %vm580, 0.0
          %596 = vst.msk [vmem:[#allocation5 + $0x10] sm:$0xff] %vm580, 0.0
          %597 = vst.msk [vmem:[#allocation5 + $0x18] sm:$0xff] %vm580, 0.0
        $region60: #{self_attention.3} parent=55 // pred_fallthru
          _
        %v598 = vld [vmem:[%s413] sm:$0xff]
        %v599 = vld [vmem:[%s413 + $0x8] sm:$0xff]
        %v600 = vld [vmem:[%s413 + $0x10] sm:$0xff]
        %v601 = vld [vmem:[%s413 + $0x18] sm:$0xff]
        %v602 = vld [vmem:[%s421] sm:$0xff]
        %v603 = vld [vmem:[%s421 + $0x8] sm:$0xff]
        %v604 = vld [vmem:[%s421 + $0x10] sm:$0xff]
        %v605 = vld [vmem:[%s421 + $0x18] sm:$0xff]
        %v606 = vld [vmem:[#allocation2] sm:$0xff]
        %v607 = vld [vmem:[#allocation2 + $0x8] sm:$0xff]
        %v608 = vld [vmem:[#allocation2 + $0x10] sm:$0xff]
        %v609 = vld [vmem:[#allocation2 + $0x18] sm:$0xff]
        %vm610 = vcmask 64512
        %v612 = vsel %vm610, %v606, 0
        %v615 = vsel %vm610, %v598, 0
        %617 = vmatpush.xpose.msra.mxu0 0.0
        %618 = vmatpush.xpose.msra.mxu0 0.0
        %619 = vmatpush.xpose.msra.mxu0 0.0
        %620 = vmatpush.xpose.msra.mxu0 0.0
        %621 = vmatpush.xpose.msra.mxu0 0.0
        %622 = vmatpush.xpose.msra.mxu0 0.0
        %623 = vmatpush.xpose.msra.mxu0 0.0
        %624 = vmatpush.xpose.msra.mxu0 0.0
        %625 = vmatpush.xpose.msra.mxu0 0.0
        %626 = vmatpush.xpose.msra.mxu0 0.0
        %627 = vmatpush.xpose.msra.mxu0 0.0
        %628 = vmatpush.xpose.msra.mxu0 0.0
        %629 = vmatpush.xpose.msra.mxu0 0.0
        %630 = vmatpush.xpose.msra.mxu0 0.0
        %631 = vmatpush.xpose.msra.mxu0 0.0
        %632 = vmatpush.xpose.msra.mxu0 %v615
        %633 = vmatmul.f32.gmra.mxu0 %v612
        %v634 = vpop.f32.mrf.mxu0
        %v635 = vadd.f32 0.0, %v634
        %636 = vdwg.mxu0
        %v638 = vsel %vm610, %v607, 0
        %v641 = vsel %vm610, %v599, 0
        %643 = vmatpush.xpose.msra.mxu0 0.0
        %644 = vmatpush.xpose.msra.mxu0 0.0
        %645 = vmatpush.xpose.msra.mxu0 0.0
        %646 = vmatpush.xpose.msra.mxu0 0.0
        %647 = vmatpush.xpose.msra.mxu0 0.0
        %648 = vmatpush.xpose.msra.mxu0 0.0
        %649 = vmatpush.xpose.msra.mxu0 0.0
        %650 = vmatpush.xpose.msra.mxu0 0.0
        %651 = vmatpush.xpose.msra.mxu0 0.0
        %652 = vmatpush.xpose.msra.mxu0 0.0
        %653 = vmatpush.xpose.msra.mxu0 0.0
        %654 = vmatpush.xpose.msra.mxu0 0.0
        %655 = vmatpush.xpose.msra.mxu0 0.0
        %656 = vmatpush.xpose.msra.mxu0 0.0
        %657 = vmatpush.xpose.msra.mxu0 0.0
        %658 = vmatpush.xpose.msra.mxu0 %v641
        %659 = vmatmul.f32.gmra.mxu0 %v638
        %v660 = vpop.f32.mrf.mxu0
        %v661 = vadd.f32 0.0, %v660
        %662 = vdwg.mxu0
        %v664 = vsel %vm610, %v608, 0
        %v667 = vsel %vm610, %v600, 0
        %669 = vmatpush.xpose.msra.mxu0 0.0
        %670 = vmatpush.xpose.msra.mxu0 0.0
        %671 = vmatpush.xpose.msra.mxu0 0.0
        %672 = vmatpush.xpose.msra.mxu0 0.0
        %673 = vmatpush.xpose.msra.mxu0 0.0
        %674 = vmatpush.xpose.msra.mxu0 0.0
        %675 = vmatpush.xpose.msra.mxu0 0.0
        %676 = vmatpush.xpose.msra.mxu0 0.0
        %677 = vmatpush.xpose.msra.mxu0 0.0
        %678 = vmatpush.xpose.msra.mxu0 0.0
        %679 = vmatpush.xpose.msra.mxu0 0.0
        %680 = vmatpush.xpose.msra.mxu0 0.0
        %681 = vmatpush.xpose.msra.mxu0 0.0
        %682 = vmatpush.xpose.msra.mxu0 0.0
        %683 = vmatpush.xpose.msra.mxu0 0.0
        %684 = vmatpush.xpose.msra.mxu0 %v667
        %685 = vmatmul.f32.gmra.mxu0 %v664
        %v686 = vpop.f32.mrf.mxu0
        %v687 = vadd.f32 0.0, %v686
        %688 = vdwg.mxu0
        %v690 = vsel %vm610, %v609, 0
        %v693 = vsel %vm610, %v601, 0
        %695 = vmatpush.xpose.msra.mxu0 0.0
        %696 = vmatpush.xpose.msra.mxu0 0.0
        %697 = vmatpush.xpose.msra.mxu0 0.0
        %698 = vmatpush.xpose.msra.mxu0 0.0
        %699 = vmatpush.xpose.msra.mxu0 0.0
        %700 = vmatpush.xpose.msra.mxu0 0.0
        %701 = vmatpush.xpose.msra.mxu0 0.0
        %702 = vmatpush.xpose.msra.mxu0 0.0
        %703 = vmatpush.xpose.msra.mxu0 0.0
        %704 = vmatpush.xpose.msra.mxu0 0.0
        %705 = vmatpush.xpose.msra.mxu0 0.0
        %706 = vmatpush.xpose.msra.mxu0 0.0
        %707 = vmatpush.xpose.msra.mxu0 0.0
        %708 = vmatpush.xpose.msra.mxu0 0.0
        %709 = vmatpush.xpose.msra.mxu0 0.0
        %710 = vmatpush.xpose.msra.mxu0 %v693
        %711 = vmatmul.f32.gmra.mxu0 %v690
        %v712 = vpop.f32.mrf.mxu0
        %v713 = vadd.f32 0.0, %v712
        %714 = vdwg.mxu0
        %v715 = vld [vmem:[#allocation3] sm:$0xff]
        %v716 = vld [vmem:[#allocation3 + $0x8] sm:$0xff]
        %v717 = vld [vmem:[#allocation3 + $0x10] sm:$0xff]
        %v718 = vld [vmem:[#allocation3 + $0x18] sm:$0xff]
        %v719 = vsel %vm610, %v635, -inf
        %720 = vmax.xlane.f32.xlu0 %v719
        %v721 = vpop.xlane.xlu0 %720
        %v722 = vsel %vm610, %v661, -inf
        %723 = vmax.xlane.f32.xlu0 %v722
        %v724 = vpop.xlane.xlu0 %723
        %v725 = vsel %vm610, %v687, -inf
        %726 = vmax.xlane.f32.xlu0 %v725
        %v727 = vpop.xlane.xlu0 %726
        %v728 = vsel %vm610, %v713, -inf
        %729 = vmax.xlane.f32.xlu0 %v728
        %v730 = vpop.xlane.xlu0 %729
        %v731 = vmax.f32 %v715, %v721
        %v732 = vmax.f32 %v716, %v724
        %v733 = vmax.f32 %v717, %v727
        %v734 = vmax.f32 %v718, %v730
        %v735 = vsub.f32 %v715, %v731
        %v736 = vsub.f32 %v716, %v732
        %v737 = vsub.f32 %v717, %v733
        %v738 = vsub.f32 %v718, %v734
        %v739 = vmul.f32 %v735, 1.442695
        %v740 = vpow.pop %v739
        %v741 = vmul.f32 %v736, 1.442695
        %v742 = vpow.pop %v741
        %v743 = vmul.f32 %v737, 1.442695
        %v744 = vpow.pop %v743
        %v745 = vmul.f32 %v738, 1.442695
        %v746 = vpow.pop %v745
        %748 = vset.pattern.permute.xlu0 0
        %749 = vperm.xlu0 %748, %v731
        %v750 = vpop.permute.xlu0 %749
        %753 = vset.pattern.permute.xlu0 0
        %754 = vperm.xlu0 %753, %v732
        %v755 = vpop.permute.xlu0 %754
        %758 = vset.pattern.permute.xlu0 0
        %759 = vperm.xlu0 %758, %v733
        %v760 = vpop.permute.xlu0 %759
        %763 = vset.pattern.permute.xlu0 0
        %764 = vperm.xlu0 %763, %v734
        %v765 = vpop.permute.xlu0 %764
        %v767 = vsub.f32 %v635, %v750
        %v768 = vsub.f32 %v661, %v755
        %v769 = vsub.f32 %v687, %v760
        %v770 = vsub.f32 %v713, %v765
        %v771 = vmul.f32 %v767, 1.442695
        %v772 = vpow.pop %v771
        %v773 = vmul.f32 %v768, 1.442695
        %v774 = vpow.pop %v773
        %v775 = vmul.f32 %v769, 1.442695
        %v776 = vpow.pop %v775
        %v777 = vmul.f32 %v770, 1.442695
        %v778 = vpow.pop %v777
        %v779 = vld [vmem:[#allocation4] sm:$0xff]
        %v780 = vld [vmem:[#allocation4 + $0x8] sm:$0xff]
        %v781 = vld [vmem:[#allocation4 + $0x10] sm:$0xff]
        %v782 = vld [vmem:[#allocation4 + $0x18] sm:$0xff]
        %v783 = vmul.f32 %v740, %v779
        %v784 = vmul.f32 %v742, %v780
        %v785 = vmul.f32 %v744, %v781
        %v786 = vmul.f32 %v746, %v782
        %v787 = vsel %vm610, %v772, 0.0
        %788 = vadd.xlane.f32.xlu0 %v787
        %v789 = vpop.xlane.xlu0 %788
        %v790 = vsel %vm610, %v774, 0.0
        %791 = vadd.xlane.f32.xlu0 %v790
        %v792 = vpop.xlane.xlu0 %791
        %v793 = vsel %vm610, %v776, 0.0
        %794 = vadd.xlane.f32.xlu0 %v793
        %v795 = vpop.xlane.xlu0 %794
        %v796 = vsel %vm610, %v778, 0.0
        %797 = vadd.xlane.f32.xlu0 %v796
        %v798 = vpop.xlane.xlu0 %797
        %v799 = vadd.f32 %v783, %v789
        %v800 = vadd.f32 %v784, %v792
        %v801 = vadd.f32 %v785, %v795
        %v802 = vadd.f32 %v786, %v798
        %vm803 = vcmask 7168
        %804 = vst.msk [vmem:[#allocation4] sm:$0xff] %vm803, %v799
        %805 = vst.msk [vmem:[#allocation4 + $0x8] sm:$0xff] %vm803, %v800
        %806 = vst.msk [vmem:[#allocation4 + $0x10] sm:$0xff] %vm803, %v801
        %807 = vst.msk [vmem:[#allocation4 + $0x18] sm:$0xff] %vm803, %v802
        %v808 = vld [vmem:[#allocation5] sm:$0xff]
        %v809 = vld [vmem:[#allocation5 + $0x8] sm:$0xff]
        %v810 = vld [vmem:[#allocation5 + $0x10] sm:$0xff]
        %v811 = vld [vmem:[#allocation5 + $0x18] sm:$0xff]
        %813 = vset.pattern.permute.xlu0 0
        %814 = vperm.xlu0 %813, %v740
        %v815 = vpop.permute.xlu0 %814
        %818 = vset.pattern.permute.xlu0 0
        %819 = vperm.xlu0 %818, %v742
        %v820 = vpop.permute.xlu0 %819
        %823 = vset.pattern.permute.xlu0 0
        %824 = vperm.xlu0 %823, %v744
        %v825 = vpop.permute.xlu0 %824
        %828 = vset.pattern.permute.xlu0 0
        %829 = vperm.xlu0 %828, %v746
        %v830 = vpop.permute.xlu0 %829
        %v832 = vmul.f32 %v815, %v808
        %v833 = vmul.f32 %v820, %v809
        %v834 = vmul.f32 %v825, %v810
        %v835 = vmul.f32 %v830, %v811
        %v837 = vsel %vm610, %v772, 0
        %839 = vmatpush.msra.mxu0 0.0
        %840 = vmatpush.msra.mxu0 0.0
        %841 = vmatpush.msra.mxu0 0.0
        %842 = vmatpush.msra.mxu0 0.0
        %843 = vmatpush.msra.mxu0 0.0
        %844 = vmatpush.msra.mxu0 0.0
        %845 = vmatpush.msra.mxu0 0.0
        %846 = vmatpush.msra.mxu0 0.0
        %847 = vmatpush.msra.mxu0 0.0
        %848 = vmatpush.msra.mxu0 0.0
        %849 = vmatpush.msra.mxu0 0.0
        %850 = vmatpush.msra.mxu0 0.0
        %851 = vmatpush.msra.mxu0 0.0
        %852 = vmatpush.msra.mxu0 0.0
        %853 = vmatpush.msra.mxu0 0.0
        %854 = vmatpush.msra.mxu0 %v602
        %855 = vmatmul.f32.gmra.mxu0 %v837
        %v856 = vpop.f32.mrf.mxu0
        %v857 = vadd.f32 0.0, %v856
        %858 = vdwg.mxu0
        %v860 = vsel %vm610, %v774, 0
        %862 = vmatpush.msra.mxu0 0.0
        %863 = vmatpush.msra.mxu0 0.0
        %864 = vmatpush.msra.mxu0 0.0
        %865 = vmatpush.msra.mxu0 0.0
        %866 = vmatpush.msra.mxu0 0.0
        %867 = vmatpush.msra.mxu0 0.0
        %868 = vmatpush.msra.mxu0 0.0
        %869 = vmatpush.msra.mxu0 0.0
        %870 = vmatpush.msra.mxu0 0.0
        %871 = vmatpush.msra.mxu0 0.0
        %872 = vmatpush.msra.mxu0 0.0
        %873 = vmatpush.msra.mxu0 0.0
        %874 = vmatpush.msra.mxu0 0.0
        %875 = vmatpush.msra.mxu0 0.0
        %876 = vmatpush.msra.mxu0 0.0
        %877 = vmatpush.msra.mxu0 %v603
        %878 = vmatmul.f32.gmra.mxu0 %v860
        %v879 = vpop.f32.mrf.mxu0
        %v880 = vadd.f32 0.0, %v879
        %881 = vdwg.mxu0
        %v883 = vsel %vm610, %v776, 0
        %885 = vmatpush.msra.mxu0 0.0
        %886 = vmatpush.msra.mxu0 0.0
        %887 = vmatpush.msra.mxu0 0.0
        %888 = vmatpush.msra.mxu0 0.0
        %889 = vmatpush.msra.mxu0 0.0
        %890 = vmatpush.msra.mxu0 0.0
        %891 = vmatpush.msra.mxu0 0.0
        %892 = vmatpush.msra.mxu0 0.0
        %893 = vmatpush.msra.mxu0 0.0
        %894 = vmatpush.msra.mxu0 0.0
        %895 = vmatpush.msra.mxu0 0.0
        %896 = vmatpush.msra.mxu0 0.0
        %897 = vmatpush.msra.mxu0 0.0
        %898 = vmatpush.msra.mxu0 0.0
        %899 = vmatpush.msra.mxu0 0.0
        %900 = vmatpush.msra.mxu0 %v604
        %901 = vmatmul.f32.gmra.mxu0 %v883
        %v902 = vpop.f32.mrf.mxu0
        %v903 = vadd.f32 0.0, %v902
        %904 = vdwg.mxu0
        %v906 = vsel %vm610, %v778, 0
        %908 = vmatpush.msra.mxu0 0.0
        %909 = vmatpush.msra.mxu0 0.0
        %910 = vmatpush.msra.mxu0 0.0
        %911 = vmatpush.msra.mxu0 0.0
        %912 = vmatpush.msra.mxu0 0.0
        %913 = vmatpush.msra.mxu0 0.0
        %914 = vmatpush.msra.mxu0 0.0
        %915 = vmatpush.msra.mxu0 0.0
        %916 = vmatpush.msra.mxu0 0.0
        %917 = vmatpush.msra.mxu0 0.0
        %918 = vmatpush.msra.mxu0 0.0
        %919 = vmatpush.msra.mxu0 0.0
        %920 = vmatpush.msra.mxu0 0.0
        %921 = vmatpush.msra.mxu0 0.0
        %922 = vmatpush.msra.mxu0 0.0
        %923 = vmatpush.msra.mxu0 %v605
        %924 = vmatmul.f32.gmra.mxu0 %v906
        %v925 = vpop.f32.mrf.mxu0
        %v926 = vadd.f32 0.0, %v925
        %927 = vdwg.mxu0
        %v928 = vadd.f32 %v832, %v857
        %v929 = vadd.f32 %v833, %v880
        %v930 = vadd.f32 %v834, %v903
        %v931 = vadd.f32 %v835, %v926
        %932 = vst.msk [vmem:[#allocation5] sm:$0xff] %vm610, %v928
        %933 = vst.msk [vmem:[#allocation5 + $0x8] sm:$0xff] %vm610, %v929
        %934 = vst.msk [vmem:[#allocation5 + $0x10] sm:$0xff] %vm610, %v930
        %935 = vst.msk [vmem:[#allocation5 + $0x18] sm:$0xff] %vm610, %v931
        %936 = vst.msk [vmem:[#allocation3] sm:$0xff] %vm803, %v731
        %937 = vst.msk [vmem:[#allocation3 + $0x8] sm:$0xff] %vm803, %v732
        %938 = vst.msk [vmem:[#allocation3 + $0x10] sm:$0xff] %vm803, %v733
        %939 = vst.msk [vmem:[#allocation3 + $0x18] sm:$0xff] %vm803, %v734
        // Predicated region
        $region61: #{self_attention.3} parent=55 // pred_check
          %p940 = pneg %p422
        $region62: #{self_attention.3} parent=55 // pred_check_branch
          %942 = sbr.rel (%p940) target = $region64
        $region63: #{self_attention.3} parent=55 // pred_region
          %v943 = vld [vmem:[#allocation5] sm:$0xff]
          %v944 = vld [vmem:[#allocation5 + $0x8] sm:$0xff]
          %v945 = vld [vmem:[#allocation5 + $0x10] sm:$0xff]
          %v946 = vld [vmem:[#allocation5 + $0x18] sm:$0xff]
          %v947 = vld [vmem:[#allocation4] sm:$0xff]
          %v948 = vld [vmem:[#allocation4 + $0x8] sm:$0xff]
          %v949 = vld [vmem:[#allocation4 + $0x10] sm:$0xff]
          %v950 = vld [vmem:[#allocation4 + $0x18] sm:$0xff]
          %v951 = vrcp.pop %v947
          %v952 = vrcp.pop %v948
          %v953 = vrcp.pop %v949
          %v954 = vrcp.pop %v950
          %956 = vset.pattern.permute.xlu0 0
          %957 = vperm.xlu0 %956, %v951
          %v958 = vpop.permute.xlu0 %957
          %961 = vset.pattern.permute.xlu0 0
          %962 = vperm.xlu0 %961, %v952
          %v963 = vpop.permute.xlu0 %962
          %966 = vset.pattern.permute.xlu0 0
          %967 = vperm.xlu0 %966, %v953
          %v968 = vpop.permute.xlu0 %967
          %971 = vset.pattern.permute.xlu0 0
          %972 = vperm.xlu0 %971, %v954
          %v973 = vpop.permute.xlu0 %972
          %v975 = vmul.f32 %v943, %v958
          %v976 = vmul.f32 %v944, %v963
          %v977 = vmul.f32 %v945, %v968
          %v978 = vmul.f32 %v946, %v973
          %v979 = vrot.slane %v977, 4
          %vm980 = vcmask 1047556
          %v981 = vsel %vm980, %v979, %v975
          %v982 = vrot.slane %v975, 4
          %v983 = vsel %vm980, %v977, %v982
          %v985 = vunpack.c.l.s4 1983009808
          %v986 = vunpack.c.0.s8 %v985
          %v987 = vperm.slane %v981, %v986
          %v989 = vunpack.c.l.s4 1983009808
          %v990 = vunpack.c.0.s8 %v989
          %v991 = vperm.slane %v983, %v990
          %v992 = vrot.slane %v978, 4
          %v993 = vsel %vm980, %v992, %v976
          %v994 = vrot.slane %v976, 4
          %v995 = vsel %vm980, %v978, %v994
          %v997 = vunpack.c.l.s4 1983009808
          %v998 = vunpack.c.0.s8 %v997
          %v999 = vperm.slane %v993, %v998
          %v1001 = vunpack.c.l.s4 1983009808
          %v1002 = vunpack.c.0.s8 %v1001
          %v1003 = vperm.slane %v995, %v1002
          %v1004 = vrot.slane %v999, 4
          %v1005 = vsel %vm980, %v1004, %v987
          %v1006 = vrot.slane %v987, 4
          %v1007 = vsel %vm980, %v999, %v1006
          %v1009 = vunpack.c.l.s4 1934713408
          %v1010 = vunpack.c.0.s8 %v1009
          %v1011 = vperm.slane %v1005, %v1010
          %v1013 = vunpack.c.l.s4 1934713408
          %v1014 = vunpack.c.0.s8 %v1013
          %v1015 = vperm.slane %v1007, %v1014
          %v1016 = vrot.slane %v1003, 4
          %v1017 = vsel %vm980, %v1016, %v991
          %v1018 = vrot.slane %v991, 4
          %v1019 = vsel %vm980, %v1003, %v1018
          %v1021 = vunpack.c.l.s4 1934713408
          %v1022 = vunpack.c.0.s8 %v1021
          %v1023 = vperm.slane %v1017, %v1022
          %v1025 = vunpack.c.l.s4 1934713408
          %v1026 = vunpack.c.0.s8 %v1025
          %v1027 = vperm.slane %v1019, %v1026
          %v1028 = vrot.slane %v1011, 4
          %v1029 = vsel %vm980, 0.0, %v1028
          %v1030 = vrot.slane %v1015, 4
          %v1031 = vsel %vm980, 0.0, %v1030
          %v1032 = vrot.slane %v1023, 4
          %v1033 = vsel %vm980, 0.0, %v1032
          %v1034 = vrot.slane %v1027, 4
          %v1035 = vsel %vm980, 0.0, %v1034
          %v1036 = vsel %vm980, %v1030, %v1011
          %v1038 = vunpack.c.l.s4 1983009808
          %v1039 = vunpack.c.0.s8 %v1038
          %v1040 = vperm.slane %v1036, %v1039
          %v1041 = vrot.slane %v1031, 4
          %v1042 = vsel %vm980, %v1041, %v1029
          %v1044 = vunpack.c.l.s4 1983009808
          %v1045 = vunpack.c.0.s8 %v1044
          %v1046 = vperm.slane %v1042, %v1045
          %v1047 = vsel %vm980, %v1034, %v1023
          %v1049 = vunpack.c.l.s4 1983009808
          %v1050 = vunpack.c.0.s8 %v1049
          %v1051 = vperm.slane %v1047, %v1050
          %v1052 = vrot.slane %v1035, 4
          %v1053 = vsel %vm980, %v1052, %v1033
          %v1055 = vunpack.c.l.s4 1983009808
          %v1056 = vunpack.c.0.s8 %v1055
          %v1057 = vperm.slane %v1053, %v1056
          %v1058 = vrot.slane %v1046, 4
          %v1059 = vsel %vm980, %v1058, %v1040
          %v1060 = vrot.slane %v1040, 4
          %v1061 = vsel %vm980, %v1046, %v1060
          %v1063 = vunpack.c.l.s4 1934713408
          %v1064 = vunpack.c.0.s8 %v1063
          %v1065 = vperm.slane %v1059, %v1064
          %v1067 = vunpack.c.l.s4 1934713408
          %v1068 = vunpack.c.0.s8 %v1067
          %v1069 = vperm.slane %v1061, %v1068
          %v1070 = vrot.slane %v1057, 4
          %v1071 = vsel %vm980, %v1070, %v1051
          %v1072 = vrot.slane %v1051, 4
          %v1073 = vsel %vm980, %v1057, %v1072
          %v1075 = vunpack.c.l.s4 1934713408
          %v1076 = vunpack.c.0.s8 %v1075
          %v1077 = vperm.slane %v1071, %v1076
          %v1079 = vunpack.c.l.s4 1934713408
          %v1080 = vunpack.c.0.s8 %v1079
          %v1081 = vperm.slane %v1073, %v1080
          %v1082 = vrot.slane %v1077, 4
          %v1083 = vsel %vm980, %v1082, %v1065
          %v1084 = vrot.slane %v1065, 4
          %v1085 = vsel %vm980, %v1077, %v1084
          %v1086 = vrot.slane %v1081, 4
          %v1087 = vsel %vm980, %v1086, %v1069
          %v1088 = vrot.slane %v1069, 4
          %v1089 = vsel %vm980, %v1081, %v1088
          %1091 = vrot.lane.b32.xlu0 %v1085, 8
          %v1092 = vpop.permute.xlu0 %1091
          %1095 = vrot.lane.b32.xlu0 %v1087, 16
          %v1096 = vpop.permute.xlu0 %1095
          %1099 = vrot.lane.b32.xlu0 %v1089, 24
          %v1100 = vpop.permute.xlu0 %1099
          %v1102 = vsel %vm610, %v1083, %v1092
          %vm1103 = vcmask 130048
          %v1104 = vsel %vm1103, %v1102, %v1096
          %vm1105 = vcmask 195584
          %v1106 = vsel %vm1105, %v1104, %v1100
          %v1107 = vld [vmem:[%s5] sm:$0xff]
          %v1108 = vld [vmem:[%s5 + $0x8] sm:$0xff]
          %v1109 = vld [vmem:[%s5 + $0x10] sm:$0xff]
          %v1110 = vld [vmem:[%s5 + $0x18] sm:$0xff]
          %v1111 = vld [vmem:[%s6] sm:$0x1]
          %v1113 = vperm.slane %v1111, 0
          %vm1115 = vcmask 261120
          %v1117 = vsel %vm1115, %v1106, 0
          %1119 = vmatpush.msra.mxu0 0.0
          %1120 = vmatpush.msra.mxu0 0.0
          %1121 = vmatpush.msra.mxu0 0.0
          %1122 = vmatpush.msra.mxu0 0.0
          %1123 = vmatpush.msra.mxu0 0.0
          %1124 = vmatpush.msra.mxu0 0.0
          %1125 = vmatpush.msra.mxu0 0.0
          %1126 = vmatpush.msra.mxu0 0.0
          %1127 = vmatpush.msra.mxu0 0.0
          %1128 = vmatpush.msra.mxu0 0.0
          %1129 = vmatpush.msra.mxu0 0.0
          %1130 = vmatpush.msra.mxu0 0.0
          %1131 = vmatpush.msra.mxu0 %v1110
          %1132 = vmatpush.msra.mxu0 %v1109
          %1133 = vmatpush.msra.mxu0 %v1108
          %1134 = vmatpush.msra.mxu0 %v1107
          %1135 = vmatmul.f32.gmra.mxu0 %v1117
          %v1136 = vpop.f32.mrf.mxu0
          %v1137 = vadd.f32 %v1113, %v1136
          %1138 = vdwg.mxu0
          %v1139 = vld [vmem:[%s405] sm:$0xff]
          %v1140 = vadd.f32 %v1137, %v1139
          %v1141 = vsel %vm1115, %v1140, 0.0
          %1142 = vadd.xlane.f32.xlu0 %v1141
          %v1143 = vpop.xlane.xlu0 %1142
          %v1144 = vrcp.pop 32.0
          %v1145 = vmul.f32 32.0, %v1144
          %v1146 = vsub.f32 1.0, %v1145
          %v1147 = vmul.f32 %v1144, %v1146
          %v1148 = vadd.f32 %v1144, %v1147
          %vm1149 = vweird.f32 %v1144
          %v1150 = vsel %vm1149, %v1144, %v1148
          %v1151 = vmul.f32 %v1143, %v1150
          %v1152 = vsub.f32 %v1140, %v1151
          %v1153 = vmul.f32 %v1152, %v1152
          %v1154 = vsel %vm1115, %v1153, 0.0
          %1155 = vadd.xlane.f32.xlu0 %v1154
          %v1156 = vpop.xlane.xlu0 %1155
          %v1157 = vmul.f32 %v1156, %v1150
          %v1158 = vld [vmem:[%s7] sm:$0x1]
          %v1159 = vadd.f32 %v1157, 1e-12
          %v1160 = vrsqrt.pop %v1159
          %v1161 = vmul.f32 %v1160, %v1159
          %v1162 = vmul.f32 %v1161, %v1160
          %v1163 = vmul.f32 0.5, %v1162
          %v1164 = vsub.f32 1.5, %v1163
          %v1165 = vmul.f32 %v1160, %v1164
          %vm1166 = vweird.f32 %v1159
          %vm1167 = vweird.f32 %v1160
          %vm1168 = vmor %vm1166, %vm1167
          %v1169 = vsel %vm1168, %v1160, %v1165
          %v1170 = vmul.f32 %v1152, %v1169
          %v1172 = vperm.slane %v1158, 0
          %v1174 = vmul.f32 %v1172, %v1170
          %v1175 = vld [vmem:[%s8] sm:$0x1]
          %v1177 = vperm.slane %v1175, 0
          %v1179 = vadd.f32 %v1174, %v1177
          %1180 = vst.msk [vmem:[%s398] sm:$0xff] %vm1115, %v1179
        $region64: #{self_attention.3} parent=55 // pred_fallthru
          _
        %s1181 = sand.u32 %s262, 1
        %s1182 = scalar_lea.sflag [#allocation7], %s1181
        %s1183 = sand.u32 %s262, 1
        %s1184 = smul.addr %s1183, 8
        %s1185 = scalar_lea.vmem [#allocation6], %s1184
        // Predicated region
        $region65: #{self_attention.3} parent=55 // pred_check
          %p1186 = pneg %p272
        $region66: #{self_attention.3} parent=55 // pred_check_branch
          %1188 = sbr.rel (%p1186) target = $region68
        $region67: #{self_attention.3} parent=55 // pred_region
          %1190 = vsyncadd %s1182, 0
          %s1191 = sadd.s32 %s29, %s28
          %s1192 = smul.addr %s1191, 8
          %s1193 = scalar_lea.hbm %s9, %s1192
          %s1195 = sshll.u32 %s1185, 4
          %s1196 = int_to_ptr.vmem [resolvable:$true] %s1195
          %s1197 = sshll.u32 %s1193, 4
          %s1198 = int_to_ptr.hbm [resolvable:$true] %s1197
          %1200 = dma.vmem_to_hbm [thread:$0]  %s1196, 128, %s1198, %s1182
        $region68: #{self_attention.3} parent=55 // pred_fallthru
          _
      $region56: #{self_attention.3} parent=5 // pred_fallthru
        _
      %p1201 = scmp.le.s32.totalorder 2, %s18
      // Predicated region
      $region69: #{self_attention.3} parent=5 // pred_check
        %p1202 = pneg %p1201
      $region70: #{self_attention.3} parent=5 // pred_check_branch
        %1204 = sbr.rel (%p1202) target = $region72
      $region71: #{self_attention.3} parent=5 // pred_region
        %s1205 = ssub.s32 %s18, 2
        // Predicated region
        $region73: #{self_attention.3} parent=71 // pred_check
          %p1206 = pneg %p278
        $region74: #{self_attention.3} parent=71 // pred_check_branch
          %1208 = sbr.rel (%p1206) target = $region76
        $region75: #{self_attention.3} parent=71 // pred_region
          %s1209 = sand.u32 %s263, 1
          %s1210 = scalar_lea.sflag [#allocation7], %s1209
          %s1211 = sand.u32 %s263, 1
          %s1212 = smul.addr %s1211, 8
          %s1213 = scalar_lea.vmem [#allocation6], %s1212
          %1215 = dma.done %s1210, 128
        $region76: #{self_attention.3} parent=71 // pred_fallthru
          _
      $region72: #{self_attention.3} parent=5 // pred_fallthru
        _
    $region6: #{self_attention.3} parent=1 // loop_footer
      %s22 = sadd.s32 1, %s18
    $region7: #{self_attention.3} parent=1 // loop_footer_branch
      %17 = sbr.rel target = $region3
    $region8: #{self_attention.3} parent=1 // loop_exit
      _
    %1216 = vsyncpa [#allocation7], 1
    %s1217 = scalar_lea.sflag [#allocation7], 1
    %1218 = vsyncpa %s1217, 1

</llo_original>
